<compile_context>
chip_gen: v7x
topology: tpu7x:2x2x1
jax: 0.10.0
libtpu: 0.0.40
codegen_flags: <defaults>
</compile_context>

<pallas_src>
import functools

import jax
import jax.numpy as jnp
from jax.experimental import pallas as pl
from jax.experimental.pallas import tpu as pltpu


def _round_up(x, m):
    return (x + m - 1) // m * m


def _mxu_lane():
    """256-lane padding target on v6e/v7x, 128 on v5e and older / unknown."""
    try:
        kind = jax.devices()[0].device_kind.lower()
    except Exception:
        return 128
    for old in ("v2", "v3", "v4", "v5"):
        if old in kind:
            return 128
    return 256


def _pad_lane(d, lane):
    return _round_up(d, 128) if d <= 128 else _round_up(d, lane)


def _encoder_kernel(x_ref, wih_ref, whh_ref, brnn_ref,
                    w1_ref, b1_ref, w2_ref, b2_ref,
                    out_ref, hid_ref, h_scr, *, n_chains):
    """One (batch-tile, time-chunk) grid step of the RNN encoder.

    x_ref   : (Tc, tb, E)   time-major embedded inputs   (matmul dtype)
    wih_ref : (E, Hp)       W_ih^T                       (matmul dtype)
    whh_ref : (Hp, Hp)      W_hh^T                       (matmul dtype)
    brnn_ref: (1, Hp)       b_ih + b_hh                  (f32)
    w1_ref  : (Hp, Hp)      linear1 W^T                  (matmul dtype)
    b1_ref  : (1, Hp)       (f32)
    w2_ref  : (Hp, Hdp)     linear2 W^T                  (matmul dtype)
    b2_ref  : (1, Hdp)      (f32)
    out_ref : (Tc, tb, Hp)  per-step hidden states       (out dtype)
    hid_ref : (tb, Hdp)     MLP head of final hidden     (f32)
    h_scr   : (tb, Hp)      f32 carry, persists across the time grid axis
    """
    Tc, tb, E = x_ref.shape
    Hp = whh_ref.shape[0]
    md = wih_ref.dtype                       # matmul input dtype (bf16 or f32)
    cs = tb // n_chains
    t_id = pl.program_id(1)

    # NOTE: correctness of the carry requires the time axis to be the
    # innermost grid axis (all t for a batch tile run before b changes).
    @pl.when(t_id == 0)
    def _():
        h_scr[...] = jnp.zeros_like(h_scr)

    # Bulk input projection for the whole time chunk, written straight into
    # out_ref (pre-activations) -> no (Tc, tb, Hp) f32 temporary kept live.
    x2d = x_ref[...].reshape(Tc * tb, E)
    xw = jnp.dot(x2d, wih_ref[...], preferred_element_type=jnp.float32)
    xw = xw + brnn_ref[...]
    out_ref[...] = xw.reshape(Tc, tb, Hp).astype(out_ref.dtype)

    whh = whh_ref[...]
    # n_chains independent recurrence chains over disjoint batch rows: while
    # one chain waits on its matmul->tanh data dependence, the other issues.
    h = [h_scr[c * cs:(c + 1) * cs, :] for c in range(n_chains)]
    for t in range(Tc):                      # static unroll (Tc is small)
        for c in range(n_chains):
            pre = out_ref[t, c * cs:(c + 1) * cs, :].astype(jnp.float32)
            pre = pre + jnp.dot(h[c].astype(md), whh,
                                preferred_element_type=jnp.float32)
            h[c] = jnp.tanh(pre)
        for c in range(n_chains):
            # Lane-dense, sublane-aligned store of the hidden state.
            out_ref[t, c * cs:(c + 1) * cs, :] = h[c].astype(out_ref.dtype)
    for c in range(n_chains):
        h_scr[c * cs:(c + 1) * cs, :] = h[c]

    # MLP head (linear1 -> ReLU -> linear2 -> tanh) on the final hidden state.
    @pl.when(t_id == pl.num_programs(1) - 1)
    def _():
        hf = h_scr[...]
        z = jnp.dot(hf.astype(md), w1_ref[...],
                    preferred_element_type=jnp.float32) + b1_ref[...]
        z = jnp.maximum(z, 0.0)
        hid = jnp.tanh(jnp.dot(z.astype(md), w2_ref[...],
                               preferred_element_type=jnp.float32) + b2_ref[...])
        hid_ref[...] = hid.astype(hid_ref.dtype)


@functools.partial(jax.jit,
                   static_argnames=("tb", "t_chunk", "matmul_dtype", "out_dtype"))
def encoder_forward(ids, params, *, tb=None, t_chunk=None,
                    matmul_dtype=jnp.bfloat16, out_dtype=jnp.bfloat16):
    """Encoder forward pass (RNN variant): JAX glue + Pallas kernel.

    Defaults: bf16 matmul operands and bf16 per-step output with f32
    accumulation / f32 carry inside the kernel.  tb is auto-picked to feed
    the MXU (>=128 rows where the batch allows, always a multiple of 16);
    t_chunk is auto-picked so the double-buffered x + out blocks stay inside
    ~40 MiB (fits v7x's 64 MiB VMEM with weights + headroom).  On v7x, choose
    B / tb so that Bp // tb >= 2 to use both TensorCores.
    """
    emb = params["embedding"]            # (V, E)
    wih_t, whh_t = params["wih_t"], params["whh_t"]
    brnn = params["b_rnn"]
    w1_t, b1 = params["w1_t"], params["b1"]
    w2_t, b2 = params["w2_t"], params["b2"]

    B, T = ids.shape
    V, E = emb.shape
    H = whh_t.shape[0]
    Hd = w2_t.shape[1]

    md = jnp.dtype(matmul_dtype)
    od = jnp.dtype(out_dtype)

    if tb is None:
        # >=128 rows feeds the MXU M dimension; 256 where the batch allows.
        tb = max(16, min(256, _round_up(B, 16)))
    assert tb % 16 == 0
    Bp = _round_up(B, tb)
    nb = Bp // tb

    lane = _mxu_lane()                   # 256 on v6e/v7x, 128 on <=v5e
    Hp = _pad_lane(H, lane)
    Hdp = _pad_lane(Hd, lane)

    if t_chunk is None:
        budget = 40 << 20                # pipelined x+out blocks (v7x-safe)
        per_t = 2 * tb * (E * md.itemsize + Hp * od.itemsize)
        t_chunk = min(T, 32)             # also bounds the static unroll
        while t_chunk > 1 and (T % t_chunk or per_t * t_chunk > budget):
            t_chunk -= 1
    assert T % t_chunk == 0
    nt = T // t_chunk

    # Two interleaved recurrence chains when the per-chain row count is a
    # clean sublane multiple for the output dtype (8 rows f32, 16 rows bf16).
    sub = max(8, 32 // od.itemsize)
    n_chains = 2 if (tb // 2) % sub == 0 else 1

    def pad2(a, r, c):
        return jnp.pad(a, ((0, r - a.shape[0]), (0, c - a.shape[1])))

    wih_p = pad2(wih_t, E, Hp).astype(md)
    whh_p = pad2(whh_t, Hp, Hp).astype(md)
    brnn_p = pad2(brnn, 1, Hp).astype(jnp.float32)
    w1_p = pad2(w1_t, Hp, Hp).astype(md)
    b1_p = pad2(b1, 1, Hp).astype(jnp.float32)
    w2_p = pad2(w2_t, Hp, Hdp).astype(md)
    b2_p = pad2(b2, 1, Hdp).astype(jnp.float32)

    # Embedding gather (eval-mode dropout = identity) produced directly in
    # time-major layout (gather ids.T) -> no extra transpose pass over x.
    # E is left unpadded: block last-dim == full array dim is legal.
    x = jnp.take(emb.astype(md), ids.T, axis=0)            # (T, B, E)
    x = jnp.pad(x, ((0, 0), (0, Bp - B), (0, 0)))          # (T, Bp, E)

    # VMEM budget: double-buffered x/out/hid blocks + single-buffered weights
    # + f32 carry scratch, with headroom; clamped to the v7x physical 64 MiB.
    w_bytes = sum(int(a.size) * a.dtype.itemsize
                  for a in (wih_p, whh_p, brnn_p, w1_p, b1_p, w2_p, b2_p))
    need = (w_bytes
            + 2 * t_chunk * tb * E * md.itemsize
            + 2 * t_chunk * tb * Hp * od.itemsize
            + 2 * tb * Hdp * 4
            + tb * Hp * 4)
    vmem_limit = int(min(max(2 * need + (8 << 20), 32 << 20), 64 << 20))

    flops = 2 * T * Bp * Hp * (E + Hp) + 2 * Bp * Hp * (Hp + Hdp)
    transcendentals = T * Bp * Hp + Bp * Hdp
    bytes_accessed = (int(x.size) * x.dtype.itemsize + w_bytes
                      + T * Bp * Hp * od.itemsize + Bp * Hdp * 4)

    def const_spec(shape):
        # Constant-index weights: single-buffered (no wasted second copy).
        return pl.BlockSpec(shape, lambda b, t: (0, 0),
                            pipeline_mode=pl.Buffered(1))

    kernel = functools.partial(_encoder_kernel, n_chains=n_chains)

    out_p, hid_p = pl.pallas_call(
        kernel,
        out_shape=(
            jax.ShapeDtypeStruct((T, Bp, Hp), od),
            jax.ShapeDtypeStruct((Bp, Hdp), jnp.float32),
        ),
        grid_spec=pltpu.PrefetchScalarGridSpec(
            num_scalar_prefetch=0,
            grid=(nb, nt),               # batch tiles parallel, time innermost
            in_specs=[
                pl.BlockSpec((t_chunk, tb, E), lambda b, t: (t, b, 0)),
                const_spec((E, Hp)),
                const_spec((Hp, Hp)),
                const_spec((1, Hp)),
                const_spec((Hp, Hp)),
                const_spec((1, Hp)),
                const_spec((Hp, Hdp)),
                const_spec((1, Hdp)),
            ],
            out_specs=(
                pl.BlockSpec((t_chunk, tb, Hp), lambda b, t: (t, b, 0)),
                pl.BlockSpec((tb, Hdp), lambda b, t: (b, 0)),
            ),
            scratch_shapes=[pltpu.VMEM((tb, Hp), jnp.float32)],
        ),
        compiler_params=pltpu.CompilerParams(
            dimension_semantics=("parallel", "arbitrary"),
            vmem_limit_bytes=vmem_limit),
        cost_estimate=pl.CostEstimate(
            flops=int(flops), transcendentals=int(transcendentals),
            bytes_accessed=int(bytes_accessed)),
    )(x, wih_p, whh_p, brnn_p, w1_p, b1_p, w2_p, b2_p)

    out = out_p[:, :B, :H].transpose(1, 0, 2)              # (B, T, H)
    hidden = hid_p[:B, :Hd][None, :, :]                    # (1, B, Hd) like nn.RNN
    return out, hidden


def _reference_forward(ids, params):
    """Pure-JAX f32 reference (matches the PyTorch module in eval mode)."""
    x = jnp.take(params["embedding"], ids, axis=0).astype(jnp.float32)
    B, T, E = x.shape
    H = params["whh_t"].shape[0]
    h = jnp.zeros((B, H), jnp.float32)
    outs = []
    for t in range(T):
        h = jnp.tanh(x[:, t, :] @ params["wih_t"] + h @ params["whh_t"]
                     + params["b_rnn"])
        outs.append(h)
    out = jnp.stack(outs, axis=1)
    z = jnp.maximum(h @ params["w1_t"] + params["b1"], 0.0)
    hid = jnp.tanh(z @ params["w2_t"] + params["b2"])
    return out, hid[None, :, :]


def _init_params(key, vocab, emb, enc_h, dec_h):
    ks = jax.random.split(key, 8)
    scale = 0.1
    return {
        "embedding": scale * jax.random.normal(ks[0], (vocab, emb), jnp.float32),
        "wih_t":     scale * jax.random.normal(ks[1], (emb, enc_h), jnp.float32),
        "whh_t":     scale * jax.random.normal(ks[2], (enc_h, enc_h), jnp.float32),
        "b_rnn":     scale * jax.random.normal(ks[3], (1, enc_h), jnp.float32),
        "w1_t":      scale * jax.random.normal(ks[4], (enc_h, enc_h), jnp.float32),
        "b1":        scale * jax.random.normal(ks[5], (1, enc_h), jnp.float32),
        "w2_t":      scale * jax.random.normal(ks[6], (enc_h, dec_h), jnp.float32),
        "b2":        scale * jax.random.normal(ks[7], (1, dec_h), jnp.float32),
    }


if __name__ == "__main__":
    # Small shapes consistent with the module's forward:
    #   input ids: (batch=2, seq=8), vocab=16, emb=32, enc_hidden=32, dec_hidden=32
    B, T = 2, 8
    VOCAB, EMB, ENC_H, DEC_H = 16, 32, 32, 32

    key = jax.random.PRNGKey(0)
    k_ids, k_params = jax.random.split(key)
    ids = jax.random.randint(k_ids, (B, T), 0, VOCAB, dtype=jnp.int32)
    params = _init_params(k_params, VOCAB, EMB, ENC_H, DEC_H)

    ref_out, ref_hidden = _reference_forward(ids, params)

    # 1) f32 operands / f32 output: tight tolerance.
    out32, hid32 = encoder_forward(ids, params,
                                   matmul_dtype=jnp.float32,
                                   out_dtype=jnp.float32)
    out32 = jax.block_until_ready(out32)
    hid32 = jax.block_until_ready(hid32)
    assert out32.shape == (B, T, ENC_H)
    assert hid32.shape == (1, B, DEC_H)
    assert jnp.allclose(out32, ref_out, atol=2e-5, rtol=2e-5)
    assert jnp.allclose(hid32, ref_hidden, atol=2e-5, rtol=2e-5)

    # 2) default bf16 operands / bf16 output: looser tolerance (the bf16
    #    re-cast of h compounds across the recurrence).
    outbf, hidbf = encoder_forward(ids, params)
    outbf = jax.block_until_ready(outbf)
    hidbf = jax.block_until_ready(hidbf)
    assert outbf.shape == (B, T, ENC_H)
    assert hidbf.shape == (1, B, DEC_H)
    assert jnp.allclose(outbf.astype(jnp.float32), ref_out, atol=2e-2, rtol=2e-2)
    assert jnp.allclose(hidbf, ref_hidden, atol=2e-2, rtol=2e-2)

    print("KERNEL_OK")
</pallas_src>

<mosaic_0001>
module attributes {stable_mosaic.version = 11 : i64} {
  func.func @_encoder_kernel(%arg0: i32, %arg1: i32, %arg2: memref<8x16x32xf32, #tpu.memory_space<vmem>>, %arg3: memref<32x128xf32, #tpu.memory_space<vmem>>, %arg4: memref<128x128xf32, #tpu.memory_space<vmem>>, %arg5: memref<1x128xf32, #tpu.memory_space<vmem>>, %arg6: memref<128x128xf32, #tpu.memory_space<vmem>>, %arg7: memref<1x128xf32, #tpu.memory_space<vmem>>, %arg8: memref<128x128xf32, #tpu.memory_space<vmem>>, %arg9: memref<1x128xf32, #tpu.memory_space<vmem>>, %arg10: memref<8x16x128xf32, #tpu.memory_space<vmem>>, %arg11: memref<16x128xf32, #tpu.memory_space<vmem>>, %arg12: memref<16x128xf32, #tpu.memory_space<vmem>>) attributes {dimension_semantics = [#tpu.dimension_semantics<parallel>, #tpu.dimension_semantics<arbitrary>], iteration_bounds = array<i64: 1, 1>, scalar_prefetch = 0 : i64, scratch_operands = 1 : i64, tpu.core_type = #tpu.core_type<tc>, window_params = [{transform_indices = @transform_0, window_bounds = array<i64: 8, 16, 32>}, {pipeline_mode = #tpu.pipeline_mode<synchronous>, transform_indices = @transform_1, window_bounds = array<i64: 32, 128>}, {pipeline_mode = #tpu.pipeline_mode<synchronous>, transform_indices = @transform_2, window_bounds = array<i64: 128, 128>}, {pipeline_mode = #tpu.pipeline_mode<synchronous>, transform_indices = @transform_3, window_bounds = array<i64: 1, 128>}, {pipeline_mode = #tpu.pipeline_mode<synchronous>, transform_indices = @transform_4, window_bounds = array<i64: 128, 128>}, {pipeline_mode = #tpu.pipeline_mode<synchronous>, transform_indices = @transform_5, window_bounds = array<i64: 1, 128>}, {pipeline_mode = #tpu.pipeline_mode<synchronous>, transform_indices = @transform_6, window_bounds = array<i64: 128, 128>}, {pipeline_mode = #tpu.pipeline_mode<synchronous>, transform_indices = @transform_7, window_bounds = array<i64: 1, 128>}, {transform_indices = @transform_8, window_bounds = array<i64: 8, 16, 128>}, {transform_indices = @transform_9, window_bounds = array<i64: 16, 128>}]} {
    %c0_i32 = arith.constant 0 : i32
    %0 = arith.cmpi eq, %arg1, %c0_i32 : i32
    %1 = arith.extui %0 : i1 to i32
    %c0_i32_0 = arith.constant 0 : i32
    %2 = arith.cmpi ne, %1, %c0_i32_0 : i32
    scf.if %2 {
      %cst_126 = arith.constant 0.000000e+00 : f32
      %148 = vector.broadcast %cst_126 : f32 to vector<16x128xf32>
      %c0_127 = arith.constant 0 : index
      %c0_128 = arith.constant 0 : index
      %149 = vector.load %arg12[%c0_127, %c0_128] : memref<16x128xf32, #tpu.memory_space<vmem>>, vector<16x128xf32>
      tpu.vector_store %arg12[%c0_127, %c0_128], %148 {strides = array<i32>} : memref<16x128xf32, #tpu.memory_space<vmem>>, vector<16x128xf32>,
    } else {
    }
    %c0 = arith.constant 0 : index
    %c0_1 = arith.constant 0 : index
    %c0_2 = arith.constant 0 : index
    %3 = vector.load %arg2[%c0, %c0_1, %c0_2] : memref<8x16x32xf32, #tpu.memory_space<vmem>>, vector<8x16x32xf32>
    %4 = vector.shape_cast %3 : vector<8x16x32xf32> to vector<128x32xf32>
    %c0_3 = arith.constant 0 : index
    %c0_4 = arith.constant 0 : index
    %5 = vector.load %arg3[%c0_3, %c0_4] : memref<32x128xf32, #tpu.memory_space<vmem>>, vector<32x128xf32>
    %cst = arith.constant dense<0.000000e+00> : vector<128x128xf32>
    %6 = tpu.matmul %4, %5, %cst {dimension_numbers = #tpu.dot_dimension_numbers<[1], [0], [0], [1], [0, 0, 1, 1], [], []>} : vector<128x32xf32>, vector<32x128xf32>, vector<128x128xf32> -> vector<128x128xf32>
    %c0_5 = arith.constant 0 : index
    %c0_6 = arith.constant 0 : index
    %7 = vector.load %arg5[%c0_5, %c0_6] : memref<1x128xf32, #tpu.memory_space<vmem>>, vector<1x128xf32>
    %8 = vector.broadcast %7 : vector<1x128xf32> to vector<128x128xf32>
    %9 = arith.addf %6, %8 : vector<128x128xf32>
    %10 = vector.shape_cast %9 : vector<128x128xf32> to vector<8x16x128xf32>
    %c0_7 = arith.constant 0 : index
    %c0_8 = arith.constant 0 : index
    %c0_9 = arith.constant 0 : index
    %11 = vector.load %arg10[%c0_7, %c0_8, %c0_9] : memref<8x16x128xf32, #tpu.memory_space<vmem>>, vector<8x16x128xf32>
    tpu.vector_store %arg10[%c0_7, %c0_8, %c0_9], %10 {strides = array<i32>} : memref<8x16x128xf32, #tpu.memory_space<vmem>>, vector<8x16x128xf32>,
    %c0_10 = arith.constant 0 : index
    %c0_11 = arith.constant 0 : index
    %12 = vector.load %arg4[%c0_10, %c0_11] : memref<128x128xf32, #tpu.memory_space<vmem>>, vector<128x128xf32>
    %c0_12 = arith.constant 0 : index
    %c0_13 = arith.constant 0 : index
    %13 = vector.load %arg12[%c0_12, %c0_13] : memref<16x128xf32, #tpu.memory_space<vmem>>, vector<8x128xf32>
    %c8 = arith.constant 8 : index
    %c0_14 = arith.constant 0 : index
    %14 = vector.load %arg12[%c8, %c0_14] : memref<16x128xf32, #tpu.memory_space<vmem>>, vector<8x128xf32>
    %c0_15 = arith.constant 0 : index
    %c0_16 = arith.constant 0 : index
    %c0_17 = arith.constant 0 : index
    %15 = vector.load %arg10[%c0_15, %c0_16, %c0_17] : memref<8x16x128xf32, #tpu.memory_space<vmem>>, vector<1x8x128xf32>
    %16 = vector.shape_cast %15 : vector<1x8x128xf32> to vector<8x128xf32>
    %cst_18 = arith.constant dense<0.000000e+00> : vector<8x128xf32>
    %17 = tpu.matmul %13, %12, %cst_18 {dimension_numbers = #tpu.dot_dimension_numbers<[1], [0], [0], [1], [0, 0, 1, 1], [], []>} : vector<8x128xf32>, vector<128x128xf32>, vector<8x128xf32> -> vector<8x128xf32>
    %18 = arith.addf %16, %17 : vector<8x128xf32>
    %19 = math.tanh %18 : vector<8x128xf32>
    %c0_19 = arith.constant 0 : index
    %c8_20 = arith.constant 8 : index
    %c0_21 = arith.constant 0 : index
    %20 = vector.load %arg10[%c0_19, %c8_20, %c0_21] : memref<8x16x128xf32, #tpu.memory_space<vmem>>, vector<1x8x128xf32>
    %21 = vector.shape_cast %20 : vector<1x8x128xf32> to vector<8x128xf32>
    %cst_22 = arith.constant dense<0.000000e+00> : vector<8x128xf32>
    %22 = tpu.matmul %14, %12, %cst_22 {dimension_numbers = #tpu.dot_dimension_numbers<[1], [0], [0], [1], [0, 0, 1, 1], [], []>} : vector<8x128xf32>, vector<128x128xf32>, vector<8x128xf32> -> vector<8x128xf32>
    %23 = arith.addf %21, %22 : vector<8x128xf32>
    %24 = math.tanh %23 : vector<8x128xf32>
    %c0_23 = arith.constant 0 : index
    %c0_24 = arith.constant 0 : index
    %c0_25 = arith.constant 0 : index
    %25 = vector.load %arg10[%c0_23, %c0_24, %c0_25] : memref<8x16x128xf32, #tpu.memory_space<vmem>>, vector<1x8x128xf32>
    %26 = vector.shape_cast %25 : vector<1x8x128xf32> to vector<8x128xf32>
    %27 = vector.shape_cast %19 : vector<8x128xf32> to vector<1x8x128xf32>
    tpu.vector_store %arg10[%c0_23, %c0_24, %c0_25], %27 {strides = array<i32>} : memref<8x16x128xf32, #tpu.memory_space<vmem>>, vector<1x8x128xf32>,
    %c0_26 = arith.constant 0 : index
    %c8_27 = arith.constant 8 : index
    %c0_28 = arith.constant 0 : index
    %28 = vector.load %arg10[%c0_26, %c8_27, %c0_28] : memref<8x16x128xf32, #tpu.memory_space<vmem>>, vector<1x8x128xf32>
    %29 = vector.shape_cast %28 : vector<1x8x128xf32> to vector<8x128xf32>
    %30 = vector.shape_cast %24 : vector<8x128xf32> to vector<1x8x128xf32>
    tpu.vector_store %arg10[%c0_26, %c8_27, %c0_28], %30 {strides = array<i32>} : memref<8x16x128xf32, #tpu.memory_space<vmem>>, vector<1x8x128xf32>,
    %c1 = arith.constant 1 : index
    %c0_29 = arith.constant 0 : index
    %c0_30 = arith.constant 0 : index
    %31 = vector.load %arg10[%c1, %c0_29, %c0_30] : memref<8x16x128xf32, #tpu.memory_space<vmem>>, vector<1x8x128xf32>
    %32 = vector.shape_cast %31 : vector<1x8x128xf32> to vector<8x128xf32>
    %cst_31 = arith.constant dense<0.000000e+00> : vector<8x128xf32>
    %33 = tpu.matmul %19, %12, %cst_31 {dimension_numbers = #tpu.dot_dimension_numbers<[1], [0], [0], [1], [0, 0, 1, 1], [], []>} : vector<8x128xf32>, vector<128x128xf32>, vector<8x128xf32> -> vector<8x128xf32>
    %34 = arith.addf %32, %33 : vector<8x128xf32>
    %35 = math.tanh %34 : vector<8x128xf32>
    %c1_32 = arith.constant 1 : index
    %c8_33 = arith.constant 8 : index
    %c0_34 = arith.constant 0 : index
    %36 = vector.load %arg10[%c1_32, %c8_33, %c0_34] : memref<8x16x128xf32, #tpu.memory_space<vmem>>, vector<1x8x128xf32>
    %37 = vector.shape_cast %36 : vector<1x8x128xf32> to vector<8x128xf32>
    %cst_35 = arith.constant dense<0.000000e+00> : vector<8x128xf32>
    %38 = tpu.matmul %24, %12, %cst_35 {dimension_numbers = #tpu.dot_dimension_numbers<[1], [0], [0], [1], [0, 0, 1, 1], [], []>} : vector<8x128xf32>, vector<128x128xf32>, vector<8x128xf32> -> vector<8x128xf32>
    %39 = arith.addf %37, %38 : vector<8x128xf32>
    %40 = math.tanh %39 : vector<8x128xf32>
    %c1_36 = arith.constant 1 : index
    %c0_37 = arith.constant 0 : index
    %c0_38 = arith.constant 0 : index
    %41 = vector.load %arg10[%c1_36, %c0_37, %c0_38] : memref<8x16x128xf32, #tpu.memory_space<vmem>>, vector<1x8x128xf32>
    %42 = vector.shape_cast %41 : vector<1x8x128xf32> to vector<8x128xf32>
    %43 = vector.shape_cast %35 : vector<8x128xf32> to vector<1x8x128xf32>
    tpu.vector_store %arg10[%c1_36, %c0_37, %c0_38], %43 {strides = array<i32>} : memref<8x16x128xf32, #tpu.memory_space<vmem>>, vector<1x8x128xf32>,
    %c1_39 = arith.constant 1 : index
    %c8_40 = arith.constant 8 : index
    %c0_41 = arith.constant 0 : index
    %44 = vector.load %arg10[%c1_39, %c8_40, %c0_41] : memref<8x16x128xf32, #tpu.memory_space<vmem>>, vector<1x8x128xf32>
    %45 = vector.shape_cast %44 : vector<1x8x128xf32> to vector<8x128xf32>
    %46 = vector.shape_cast %40 : vector<8x128xf32> to vector<1x8x128xf32>
    tpu.vector_store %arg10[%c1_39, %c8_40, %c0_41], %46 {strides = array<i32>} : memref<8x16x128xf32, #tpu.memory_space<vmem>>, vector<1x8x128xf32>,
    %c2 = arith.constant 2 : index
    %c0_42 = arith.constant 0 : index
    %c0_43 = arith.constant 0 : index
    %47 = vector.load %arg10[%c2, %c0_42, %c0_43] : memref<8x16x128xf32, #tpu.memory_space<vmem>>, vector<1x8x128xf32>
    %48 = vector.shape_cast %47 : vector<1x8x128xf32> to vector<8x128xf32>
    %cst_44 = arith.constant dense<0.000000e+00> : vector<8x128xf32>
    %49 = tpu.matmul %35, %12, %cst_44 {dimension_numbers = #tpu.dot_dimension_numbers<[1], [0], [0], [1], [0, 0, 1, 1], [], []>} : vector<8x128xf32>, vector<128x128xf32>, vector<8x128xf32> -> vector<8x128xf32>
    %50 = arith.addf %48, %49 : vector<8x128xf32>
    %51 = math.tanh %50 : vector<8x128xf32>
    %c2_45 = arith.constant 2 : index
    %c8_46 = arith.constant 8 : index
    %c0_47 = arith.constant 0 : index
    %52 = vector.load %arg10[%c2_45, %c8_46, %c0_47] : memref<8x16x128xf32, #tpu.memory_space<vmem>>, vector<1x8x128xf32>
    %53 = vector.shape_cast %52 : vector<1x8x128xf32> to vector<8x128xf32>
    %cst_48 = arith.constant dense<0.000000e+00> : vector<8x128xf32>
    %54 = tpu.matmul %40, %12, %cst_48 {dimension_numbers = #tpu.dot_dimension_numbers<[1], [0], [0], [1], [0, 0, 1, 1], [], []>} : vector<8x128xf32>, vector<128x128xf32>, vector<8x128xf32> -> vector<8x128xf32>
    %55 = arith.addf %53, %54 : vector<8x128xf32>
    %56 = math.tanh %55 : vector<8x128xf32>
    %c2_49 = arith.constant 2 : index
    %c0_50 = arith.constant 0 : index
    %c0_51 = arith.constant 0 : index
    %57 = vector.load %arg10[%c2_49, %c0_50, %c0_51] : memref<8x16x128xf32, #tpu.memory_space<vmem>>, vector<1x8x128xf32>
    %58 = vector.shape_cast %57 : vector<1x8x128xf32> to vector<8x128xf32>
    %59 = vector.shape_cast %51 : vector<8x128xf32> to vector<1x8x128xf32>
    tpu.vector_store %arg10[%c2_49, %c0_50, %c0_51], %59 {strides = array<i32>} : memref<8x16x128xf32, #tpu.memory_space<vmem>>, vector<1x8x128xf32>,
    %c2_52 = arith.constant 2 : index
    %c8_53 = arith.constant 8 : index
    %c0_54 = arith.constant 0 : index
    %60 = vector.load %arg10[%c2_52, %c8_53, %c0_54] : memref<8x16x128xf32, #tpu.memory_space<vmem>>, vector<1x8x128xf32>
    %61 = vector.shape_cast %60 : vector<1x8x128xf32> to vector<8x128xf32>
    %62 = vector.shape_cast %56 : vector<8x128xf32> to vector<1x8x128xf32>
    tpu.vector_store %arg10[%c2_52, %c8_53, %c0_54], %62 {strides = array<i32>} : memref<8x16x128xf32, #tpu.memory_space<vmem>>, vector<1x8x128xf32>,
    %c3 = arith.constant 3 : index
    %c0_55 = arith.constant 0 : index
    %c0_56 = arith.constant 0 : index
    %63 = vector.load %arg10[%c3, %c0_55, %c0_56] : memref<8x16x128xf32, #tpu.memory_space<vmem>>, vector<1x8x128xf32>
    %64 = vector.shape_cast %63 : vector<1x8x128xf32> to vector<8x128xf32>
    %cst_57 = arith.constant dense<0.000000e+00> : vector<8x128xf32>
    %65 = tpu.matmul %51, %12, %cst_57 {dimension_numbers = #tpu.dot_dimension_numbers<[1], [0], [0], [1], [0, 0, 1, 1], [], []>} : vector<8x128xf32>, vector<128x128xf32>, vector<8x128xf32> -> vector<8x128xf32>
    %66 = arith.addf %64, %65 : vector<8x128xf32>
    %67 = math.tanh %66 : vector<8x128xf32>
    %c3_58 = arith.constant 3 : index
    %c8_59 = arith.constant 8 : index
    %c0_60 = arith.constant 0 : index
    %68 = vector.load %arg10[%c3_58, %c8_59, %c0_60] : memref<8x16x128xf32, #tpu.memory_space<vmem>>, vector<1x8x128xf32>
    %69 = vector.shape_cast %68 : vector<1x8x128xf32> to vector<8x128xf32>
    %cst_61 = arith.constant dense<0.000000e+00> : vector<8x128xf32>
    %70 = tpu.matmul %56, %12, %cst_61 {dimension_numbers = #tpu.dot_dimension_numbers<[1], [0], [0], [1], [0, 0, 1, 1], [], []>} : vector<8x128xf32>, vector<128x128xf32>, vector<8x128xf32> -> vector<8x128xf32>
    %71 = arith.addf %69, %70 : vector<8x128xf32>
    %72 = math.tanh %71 : vector<8x128xf32>
    %c3_62 = arith.constant 3 : index
    %c0_63 = arith.constant 0 : index
    %c0_64 = arith.constant 0 : index
    %73 = vector.load %arg10[%c3_62, %c0_63, %c0_64] : memref<8x16x128xf32, #tpu.memory_space<vmem>>, vector<1x8x128xf32>
    %74 = vector.shape_cast %73 : vector<1x8x128xf32> to vector<8x128xf32>
    %75 = vector.shape_cast %67 : vector<8x128xf32> to vector<1x8x128xf32>
    tpu.vector_store %arg10[%c3_62, %c0_63, %c0_64], %75 {strides = array<i32>} : memref<8x16x128xf32, #tpu.memory_space<vmem>>, vector<1x8x128xf32>,
    %c3_65 = arith.constant 3 : index
    %c8_66 = arith.constant 8 : index
    %c0_67 = arith.constant 0 : index
    %76 = vector.load %arg10[%c3_65, %c8_66, %c0_67] : memref<8x16x128xf32, #tpu.memory_space<vmem>>, vector<1x8x128xf32>
    %77 = vector.shape_cast %76 : vector<1x8x128xf32> to vector<8x128xf32>
    %78 = vector.shape_cast %72 : vector<8x128xf32> to vector<1x8x128xf32>
    tpu.vector_store %arg10[%c3_65, %c8_66, %c0_67], %78 {strides = array<i32>} : memref<8x16x128xf32, #tpu.memory_space<vmem>>, vector<1x8x128xf32>,
    %c4 = arith.constant 4 : index
    %c0_68 = arith.constant 0 : index
    %c0_69 = arith.constant 0 : index
    %79 = vector.load %arg10[%c4, %c0_68, %c0_69] : memref<8x16x128xf32, #tpu.memory_space<vmem>>, vector<1x8x128xf32>
    %80 = vector.shape_cast %79 : vector<1x8x128xf32> to vector<8x128xf32>
    %cst_70 = arith.constant dense<0.000000e+00> : vector<8x128xf32>
    %81 = tpu.matmul %67, %12, %cst_70 {dimension_numbers = #tpu.dot_dimension_numbers<[1], [0], [0], [1], [0, 0, 1, 1], [], []>} : vector<8x128xf32>, vector<128x128xf32>, vector<8x128xf32> -> vector<8x128xf32>
    %82 = arith.addf %80, %81 : vector<8x128xf32>
    %83 = math.tanh %82 : vector<8x128xf32>
    %c4_71 = arith.constant 4 : index
    %c8_72 = arith.constant 8 : index
    %c0_73 = arith.constant 0 : index
    %84 = vector.load %arg10[%c4_71, %c8_72, %c0_73] : memref<8x16x128xf32, #tpu.memory_space<vmem>>, vector<1x8x128xf32>
    %85 = vector.shape_cast %84 : vector<1x8x128xf32> to vector<8x128xf32>
    %cst_74 = arith.constant dense<0.000000e+00> : vector<8x128xf32>
    %86 = tpu.matmul %72, %12, %cst_74 {dimension_numbers = #tpu.dot_dimension_numbers<[1], [0], [0], [1], [0, 0, 1, 1], [], []>} : vector<8x128xf32>, vector<128x128xf32>, vector<8x128xf32> -> vector<8x128xf32>
    %87 = arith.addf %85, %86 : vector<8x128xf32>
    %88 = math.tanh %87 : vector<8x128xf32>
    %c4_75 = arith.constant 4 : index
    %c0_76 = arith.constant 0 : index
    %c0_77 = arith.constant 0 : index
    %89 = vector.load %arg10[%c4_75, %c0_76, %c0_77] : memref<8x16x128xf32, #tpu.memory_space<vmem>>, vector<1x8x128xf32>
    %90 = vector.shape_cast %89 : vector<1x8x128xf32> to vector<8x128xf32>
    %91 = vector.shape_cast %83 : vector<8x128xf32> to vector<1x8x128xf32>
    tpu.vector_store %arg10[%c4_75, %c0_76, %c0_77], %91 {strides = array<i32>} : memref<8x16x128xf32, #tpu.memory_space<vmem>>, vector<1x8x128xf32>,
    %c4_78 = arith.constant 4 : index
    %c8_79 = arith.constant 8 : index
    %c0_80 = arith.constant 0 : index
    %92 = vector.load %arg10[%c4_78, %c8_79, %c0_80] : memref<8x16x128xf32, #tpu.memory_space<vmem>>, vector<1x8x128xf32>
    %93 = vector.shape_cast %92 : vector<1x8x128xf32> to vector<8x128xf32>
    %94 = vector.shape_cast %88 : vector<8x128xf32> to vector<1x8x128xf32>
    tpu.vector_store %arg10[%c4_78, %c8_79, %c0_80], %94 {strides = array<i32>} : memref<8x16x128xf32, #tpu.memory_space<vmem>>, vector<1x8x128xf32>,
    %c5 = arith.constant 5 : index
    %c0_81 = arith.constant 0 : index
    %c0_82 = arith.constant 0 : index
    %95 = vector.load %arg10[%c5, %c0_81, %c0_82] : memref<8x16x128xf32, #tpu.memory_space<vmem>>, vector<1x8x128xf32>
    %96 = vector.shape_cast %95 : vector<1x8x128xf32> to vector<8x128xf32>
    %cst_83 = arith.constant dense<0.000000e+00> : vector<8x128xf32>
    %97 = tpu.matmul %83, %12, %cst_83 {dimension_numbers = #tpu.dot_dimension_numbers<[1], [0], [0], [1], [0, 0, 1, 1], [], []>} : vector<8x128xf32>, vector<128x128xf32>, vector<8x128xf32> -> vector<8x128xf32>
    %98 = arith.addf %96, %97 : vector<8x128xf32>
    %99 = math.tanh %98 : vector<8x128xf32>
    %c5_84 = arith.constant 5 : index
    %c8_85 = arith.constant 8 : index
    %c0_86 = arith.constant 0 : index
    %100 = vector.load %arg10[%c5_84, %c8_85, %c0_86] : memref<8x16x128xf32, #tpu.memory_space<vmem>>, vector<1x8x128xf32>
    %101 = vector.shape_cast %100 : vector<1x8x128xf32> to vector<8x128xf32>
    %cst_87 = arith.constant dense<0.000000e+00> : vector<8x128xf32>
    %102 = tpu.matmul %88, %12, %cst_87 {dimension_numbers = #tpu.dot_dimension_numbers<[1], [0], [0], [1], [0, 0, 1, 1], [], []>} : vector<8x128xf32>, vector<128x128xf32>, vector<8x128xf32> -> vector<8x128xf32>
    %103 = arith.addf %101, %102 : vector<8x128xf32>
    %104 = math.tanh %103 : vector<8x128xf32>
    %c5_88 = arith.constant 5 : index
    %c0_89 = arith.constant 0 : index
    %c0_90 = arith.constant 0 : index
    %105 = vector.load %arg10[%c5_88, %c0_89, %c0_90] : memref<8x16x128xf32, #tpu.memory_space<vmem>>, vector<1x8x128xf32>
    %106 = vector.shape_cast %105 : vector<1x8x128xf32> to vector<8x128xf32>
    %107 = vector.shape_cast %99 : vector<8x128xf32> to vector<1x8x128xf32>
    tpu.vector_store %arg10[%c5_88, %c0_89, %c0_90], %107 {strides = array<i32>} : memref<8x16x128xf32, #tpu.memory_space<vmem>>, vector<1x8x128xf32>,
    %c5_91 = arith.constant 5 : index
    %c8_92 = arith.constant 8 : index
    %c0_93 = arith.constant 0 : index
    %108 = vector.load %arg10[%c5_91, %c8_92, %c0_93] : memref<8x16x128xf32, #tpu.memory_space<vmem>>, vector<1x8x128xf32>
    %109 = vector.shape_cast %108 : vector<1x8x128xf32> to vector<8x128xf32>
    %110 = vector.shape_cast %104 : vector<8x128xf32> to vector<1x8x128xf32>
    tpu.vector_store %arg10[%c5_91, %c8_92, %c0_93], %110 {strides = array<i32>} : memref<8x16x128xf32, #tpu.memory_space<vmem>>, vector<1x8x128xf32>,
    %c6 = arith.constant 6 : index
    %c0_94 = arith.constant 0 : index
    %c0_95 = arith.constant 0 : index
    %111 = vector.load %arg10[%c6, %c0_94, %c0_95] : memref<8x16x128xf32, #tpu.memory_space<vmem>>, vector<1x8x128xf32>
    %112 = vector.shape_cast %111 : vector<1x8x128xf32> to vector<8x128xf32>
    %cst_96 = arith.constant dense<0.000000e+00> : vector<8x128xf32>
    %113 = tpu.matmul %99, %12, %cst_96 {dimension_numbers = #tpu.dot_dimension_numbers<[1], [0], [0], [1], [0, 0, 1, 1], [], []>} : vector<8x128xf32>, vector<128x128xf32>, vector<8x128xf32> -> vector<8x128xf32>
    %114 = arith.addf %112, %113 : vector<8x128xf32>
    %115 = math.tanh %114 : vector<8x128xf32>
    %c6_97 = arith.constant 6 : index
    %c8_98 = arith.constant 8 : index
    %c0_99 = arith.constant 0 : index
    %116 = vector.load %arg10[%c6_97, %c8_98, %c0_99] : memref<8x16x128xf32, #tpu.memory_space<vmem>>, vector<1x8x128xf32>
    %117 = vector.shape_cast %116 : vector<1x8x128xf32> to vector<8x128xf32>
    %cst_100 = arith.constant dense<0.000000e+00> : vector<8x128xf32>
    %118 = tpu.matmul %104, %12, %cst_100 {dimension_numbers = #tpu.dot_dimension_numbers<[1], [0], [0], [1], [0, 0, 1, 1], [], []>} : vector<8x128xf32>, vector<128x128xf32>, vector<8x128xf32> -> vector<8x128xf32>
    %119 = arith.addf %117, %118 : vector<8x128xf32>
    %120 = math.tanh %119 : vector<8x128xf32>
    %c6_101 = arith.constant 6 : index
    %c0_102 = arith.constant 0 : index
    %c0_103 = arith.constant 0 : index
    %121 = vector.load %arg10[%c6_101, %c0_102, %c0_103] : memref<8x16x128xf32, #tpu.memory_space<vmem>>, vector<1x8x128xf32>
    %122 = vector.shape_cast %121 : vector<1x8x128xf32> to vector<8x128xf32>
    %123 = vector.shape_cast %115 : vector<8x128xf32> to vector<1x8x128xf32>
    tpu.vector_store %arg10[%c6_101, %c0_102, %c0_103], %123 {strides = array<i32>} : memref<8x16x128xf32, #tpu.memory_space<vmem>>, vector<1x8x128xf32>,
    %c6_104 = arith.constant 6 : index
    %c8_105 = arith.constant 8 : index
    %c0_106 = arith.constant 0 : index
    %124 = vector.load %arg10[%c6_104, %c8_105, %c0_106] : memref<8x16x128xf32, #tpu.memory_space<vmem>>, vector<1x8x128xf32>
    %125 = vector.shape_cast %124 : vector<1x8x128xf32> to vector<8x128xf32>
    %126 = vector.shape_cast %120 : vector<8x128xf32> to vector<1x8x128xf32>
    tpu.vector_store %arg10[%c6_104, %c8_105, %c0_106], %126 {strides = array<i32>} : memref<8x16x128xf32, #tpu.memory_space<vmem>>, vector<1x8x128xf32>,
    %c7 = arith.constant 7 : index
    %c0_107 = arith.constant 0 : index
    %c0_108 = arith.constant 0 : index
    %127 = vector.load %arg10[%c7, %c0_107, %c0_108] : memref<8x16x128xf32, #tpu.memory_space<vmem>>, vector<1x8x128xf32>
    %128 = vector.shape_cast %127 : vector<1x8x128xf32> to vector<8x128xf32>
    %cst_109 = arith.constant dense<0.000000e+00> : vector<8x128xf32>
    %129 = tpu.matmul %115, %12, %cst_109 {dimension_numbers = #tpu.dot_dimension_numbers<[1], [0], [0], [1], [0, 0, 1, 1], [], []>} : vector<8x128xf32>, vector<128x128xf32>, vector<8x128xf32> -> vector<8x128xf32>
    %130 = arith.addf %128, %129 : vector<8x128xf32>
    %131 = math.tanh %130 : vector<8x128xf32>
    %c7_110 = arith.constant 7 : index
    %c8_111 = arith.constant 8 : index
    %c0_112 = arith.constant 0 : index
    %132 = vector.load %arg10[%c7_110, %c8_111, %c0_112] : memref<8x16x128xf32, #tpu.memory_space<vmem>>, vector<1x8x128xf32>
    %133 = vector.shape_cast %132 : vector<1x8x128xf32> to vector<8x128xf32>
    %cst_113 = arith.constant dense<0.000000e+00> : vector<8x128xf32>
    %134 = tpu.matmul %120, %12, %cst_113 {dimension_numbers = #tpu.dot_dimension_numbers<[1], [0], [0], [1], [0, 0, 1, 1], [], []>} : vector<8x128xf32>, vector<128x128xf32>, vector<8x128xf32> -> vector<8x128xf32>
    %135 = arith.addf %133, %134 : vector<8x128xf32>
    %136 = math.tanh %135 : vector<8x128xf32>
    %c7_114 = arith.constant 7 : index
    %c0_115 = arith.constant 0 : index
    %c0_116 = arith.constant 0 : index
    %137 = vector.load %arg10[%c7_114, %c0_115, %c0_116] : memref<8x16x128xf32, #tpu.memory_space<vmem>>, vector<1x8x128xf32>
    %138 = vector.shape_cast %137 : vector<1x8x128xf32> to vector<8x128xf32>
    %139 = vector.shape_cast %131 : vector<8x128xf32> to vector<1x8x128xf32>
    tpu.vector_store %arg10[%c7_114, %c0_115, %c0_116], %139 {strides = array<i32>} : memref<8x16x128xf32, #tpu.memory_space<vmem>>, vector<1x8x128xf32>,
    %c7_117 = arith.constant 7 : index
    %c8_118 = arith.constant 8 : index
    %c0_119 = arith.constant 0 : index
    %140 = vector.load %arg10[%c7_117, %c8_118, %c0_119] : memref<8x16x128xf32, #tpu.memory_space<vmem>>, vector<1x8x128xf32>
    %141 = vector.shape_cast %140 : vector<1x8x128xf32> to vector<8x128xf32>
    %142 = vector.shape_cast %136 : vector<8x128xf32> to vector<1x8x128xf32>
    tpu.vector_store %arg10[%c7_117, %c8_118, %c0_119], %142 {strides = array<i32>} : memref<8x16x128xf32, #tpu.memory_space<vmem>>, vector<1x8x128xf32>,
    %c0_120 = arith.constant 0 : index
    %c0_121 = arith.constant 0 : index
    %143 = vector.load %arg12[%c0_120, %c0_121] : memref<16x128xf32, #tpu.memory_space<vmem>>, vector<8x128xf32>
    tpu.vector_store %arg12[%c0_120, %c0_121], %131 {strides = array<i32>} : memref<16x128xf32, #tpu.memory_space<vmem>>, vector<8x128xf32>,
    %c8_122 = arith.constant 8 : index
    %c0_123 = arith.constant 0 : index
    %144 = vector.load %arg12[%c8_122, %c0_123] : memref<16x128xf32, #tpu.memory_space<vmem>>, vector<8x128xf32>
    tpu.vector_store %arg12[%c8_122, %c0_123], %136 {strides = array<i32>} : memref<16x128xf32, #tpu.memory_space<vmem>>, vector<8x128xf32>,
    %c0_i32_124 = arith.constant 0 : i32
    %145 = arith.cmpi eq, %arg1, %c0_i32_124 : i32
    %146 = arith.extui %145 : i1 to i32
    %c0_i32_125 = arith.constant 0 : i32
    %147 = arith.cmpi ne, %146, %c0_i32_125 : i32
    scf.if %147 {
      %c0_126 = arith.constant 0 : index
      %c0_127 = arith.constant 0 : index
      %148 = vector.load %arg12[%c0_126, %c0_127] : memref<16x128xf32, #tpu.memory_space<vmem>>, vector<16x128xf32>
      %c0_128 = arith.constant 0 : index
      %c0_129 = arith.constant 0 : index
      %149 = vector.load %arg6[%c0_128, %c0_129] : memref<128x128xf32, #tpu.memory_space<vmem>>, vector<128x128xf32>
      %cst_130 = arith.constant dense<0.000000e+00> : vector<16x128xf32>
      %150 = tpu.matmul %148, %149, %cst_130 {dimension_numbers = #tpu.dot_dimension_numbers<[1], [0], [0], [1], [0, 0, 1, 1], [], []>} : vector<16x128xf32>, vector<128x128xf32>, vector<16x128xf32> -> vector<16x128xf32>
      %c0_131 = arith.constant 0 : index
      %c0_132 = arith.constant 0 : index
      %151 = vector.load %arg7[%c0_131, %c0_132] : memref<1x128xf32, #tpu.memory_space<vmem>>, vector<1x128xf32>
      %152 = vector.broadcast %151 : vector<1x128xf32> to vector<16x128xf32>
      %153 = arith.addf %150, %152 : vector<16x128xf32>
      %cst_133 = arith.constant 0.000000e+00 : f32
      %154 = vector.broadcast %cst_133 : f32 to vector<16x128xf32>
      %155 = arith.maximumf %153, %154 : vector<16x128xf32>
      %c0_134 = arith.constant 0 : index
      %c0_135 = arith.constant 0 : index
      %156 = vector.load %arg8[%c0_134, %c0_135] : memref<128x128xf32, #tpu.memory_space<vmem>>, vector<128x128xf32>
      %cst_136 = arith.constant dense<0.000000e+00> : vector<16x128xf32>
      %157 = tpu.matmul %155, %156, %cst_136 {dimension_numbers = #tpu.dot_dimension_numbers<[1], [0], [0], [1], [0, 0, 1, 1], [], []>} : vector<16x128xf32>, vector<128x128xf32>, vector<16x128xf32> -> vector<16x128xf32>
      %c0_137 = arith.constant 0 : index
      %c0_138 = arith.constant 0 : index
      %158 = vector.load %arg9[%c0_137, %c0_138] : memref<1x128xf32, #tpu.memory_space<vmem>>, vector<1x128xf32>
      %159 = vector.broadcast %158 : vector<1x128xf32> to vector<16x128xf32>
      %160 = arith.addf %157, %159 : vector<16x128xf32>
      %161 = math.tanh %160 : vector<16x128xf32>
      %c0_139 = arith.constant 0 : index
      %c0_140 = arith.constant 0 : index
      %162 = vector.load %arg11[%c0_139, %c0_140] : memref<16x128xf32, #tpu.memory_space<vmem>>, vector<16x128xf32>
      tpu.vector_store %arg11[%c0_139, %c0_140], %161 {strides = array<i32>} : memref<16x128xf32, #tpu.memory_space<vmem>>, vector<16x128xf32>,
    } else {
    }
    return
  }
  func.func @transform_0(%arg0: i32, %arg1: i32) -> (i32, i32, i32) {
    %c0_i32 = arith.constant 0 : i32
    %c0_i32_0 = arith.constant 0 : i32
    return %arg1, %arg0, %c0_i32 : i32, i32, i32
  }
  func.func @transform_1(%arg0: i32, %arg1: i32) -> (i32, i32) {
    %c0_i32 = arith.constant 0 : i32
    %c0_i32_0 = arith.constant 0 : i32
    %c0_i32_1 = arith.constant 0 : i32
    return %c0_i32, %c0_i32_0 : i32, i32
  }
  func.func @transform_2(%arg0: i32, %arg1: i32) -> (i32, i32) {
    %c0_i32 = arith.constant 0 : i32
    %c0_i32_0 = arith.constant 0 : i32
    %c0_i32_1 = arith.constant 0 : i32
    return %c0_i32, %c0_i32_0 : i32, i32
  }
  func.func @transform_3(%arg0: i32, %arg1: i32) -> (i32, i32) {
    %c0_i32 = arith.constant 0 : i32
    %c0_i32_0 = arith.constant 0 : i32
    %c0_i32_1 = arith.constant 0 : i32
    return %c0_i32, %c0_i32_0 : i32, i32
  }
  func.func @transform_4(%arg0: i32, %arg1: i32) -> (i32, i32) {
    %c0_i32 = arith.constant 0 : i32
    %c0_i32_0 = arith.constant 0 : i32
    %c0_i32_1 = arith.constant 0 : i32
    return %c0_i32, %c0_i32_0 : i32, i32
  }
  func.func @transform_5(%arg0: i32, %arg1: i32) -> (i32, i32) {
    %c0_i32 = arith.constant 0 : i32
    %c0_i32_0 = arith.constant 0 : i32
    %c0_i32_1 = arith.constant 0 : i32
    return %c0_i32, %c0_i32_0 : i32, i32
  }
  func.func @transform_6(%arg0: i32, %arg1: i32) -> (i32, i32) {
    %c0_i32 = arith.constant 0 : i32
    %c0_i32_0 = arith.constant 0 : i32
    %c0_i32_1 = arith.constant 0 : i32
    return %c0_i32, %c0_i32_0 : i32, i32
  }
  func.func @transform_7(%arg0: i32, %arg1: i32) -> (i32, i32) {
    %c0_i32 = arith.constant 0 : i32
    %c0_i32_0 = arith.constant 0 : i32
    %c0_i32_1 = arith.constant 0 : i32
    return %c0_i32, %c0_i32_0 : i32, i32
  }
  func.func @transform_8(%arg0: i32, %arg1: i32) -> (i32, i32, i32) {
    %c0_i32 = arith.constant 0 : i32
    %c0_i32_0 = arith.constant 0 : i32
    return %arg1, %arg0, %c0_i32 : i32, i32, i32
  }
  func.func @transform_9(%arg0: i32, %arg1: i32) -> (i32, i32) {
    %c0_i32 = arith.constant 0 : i32
    %c0_i32_0 = arith.constant 0 : i32
    return %arg0, %c0_i32 : i32, i32
  }
}

</mosaic_0001>

<llo_original>
// kernel: encoder_forward.1
$region0: #{encoder_forward.1}
  #allocation0 [shape = 'u32[]', space=smem, size = 0x4, offset = 0x4, fixed_abs, tag = 'smem constant byte address 0x4 - core index']
  #allocation1 [shape = 'u32[144,128]{1,0:T(1,128)}', space=vmem, size = 0x12000, scoped, tag = 'internal scratch']
  #allocation2 [shape = 'f32[16,128]{1,0:T(8,128)}', space=vmem, size = 0x2000, scoped, tag = 'scratch operand']
  %s0 = inlined_call_operand.vmem [shape: f32[8,16,32], index: 0, kind: input, shape index: {}]
  %s1 = inlined_call_operand.vmem [shape: f32[32,128], index: 1, kind: input, shape index: {}]
  %s2 = inlined_call_operand.vmem [shape: f32[128,128], index: 2, kind: input, shape index: {}]
  %s3 = inlined_call_operand.vmem [shape: f32[1,128], index: 3, kind: input, shape index: {}]
  %s4 = inlined_call_operand.vmem [shape: f32[128,128], index: 4, kind: input, shape index: {}]
  %s5 = inlined_call_operand.vmem [shape: f32[1,128], index: 5, kind: input, shape index: {}]
  %s6 = inlined_call_operand.vmem [shape: f32[128,128], index: 6, kind: input, shape index: {}]
  %s7 = inlined_call_operand.vmem [shape: f32[1,128], index: 7, kind: input, shape index: {}]
  %s8 = inlined_call_operand.vmem [shape: f32[8,16,128], index: 8, kind: output, shape index: {0}]
  %s9 = inlined_call_operand.vmem [shape: f32[16,128], index: 9, kind: output, shape index: {1}]
  %10 = xla_tuple %s8, %s9
  %s11 = sld [smem:[#allocation0]]
  $region58: #{encoder_forward.1} parent=0
    _
  %s13 = ssub.s32 1, %s11
  %s14 = scalar_select 0, %s13, %s11
  // Predicated region
  $region2: #{encoder_forward.1} parent=0 // pred_check
    _
  $region3: #{encoder_forward.1} parent=0 // pred_check_branch
    %16 = sbr.rel (0) target = $region5
  $region4: #{encoder_forward.1} parent=0 // pred_region
    _
  $region5: #{encoder_forward.1} parent=0 // pred_fallthru
    _
  // Predicated region
  $region6: #{encoder_forward.1} parent=0 // pred_check
    _
  $region7: #{encoder_forward.1} parent=0 // pred_check_branch
    %18 = sbr.rel (0) target = $region9
  $region8: #{encoder_forward.1} parent=0 // pred_region
    _
  $region9: #{encoder_forward.1} parent=0 // pred_fallthru
    _
  // Predicated region
  $region10: #{encoder_forward.1} parent=0 // pred_check
    _
  $region11: #{encoder_forward.1} parent=0 // pred_check_branch
    %20 = sbr.rel (0) target = $region13
  $region12: #{encoder_forward.1} parent=0 // pred_region
    _
  $region13: #{encoder_forward.1} parent=0 // pred_fallthru
    _
  // Predicated region
  $region14: #{encoder_forward.1} parent=0 // pred_check
    _
  $region15: #{encoder_forward.1} parent=0 // pred_check_branch
    %22 = sbr.rel (0) target = $region17
  $region16: #{encoder_forward.1} parent=0 // pred_region
    _
  $region17: #{encoder_forward.1} parent=0 // pred_fallthru
    _
  // Predicated region
  $region18: #{encoder_forward.1} parent=0 // pred_check
    _
  $region19: #{encoder_forward.1} parent=0 // pred_check_branch
    %24 = sbr.rel (0) target = $region21
  $region20: #{encoder_forward.1} parent=0 // pred_region
    _
  $region21: #{encoder_forward.1} parent=0 // pred_fallthru
    _
  // Predicated region
  $region22: #{encoder_forward.1} parent=0 // pred_check
    _
  $region23: #{encoder_forward.1} parent=0 // pred_check_branch
    %26 = sbr.rel (0) target = $region25
  $region24: #{encoder_forward.1} parent=0 // pred_region
    _
  $region25: #{encoder_forward.1} parent=0 // pred_fallthru
    _
  // Predicated region
  $region26: #{encoder_forward.1} parent=0 // pred_check
    _
  $region27: #{encoder_forward.1} parent=0 // pred_check_branch
    %28 = sbr.rel (0) target = $region29
  $region28: #{encoder_forward.1} parent=0 // pred_region
    _
  $region29: #{encoder_forward.1} parent=0 // pred_fallthru
    _
  // Predicated region
  $region30: #{encoder_forward.1} parent=0 // pred_check
    _
  $region31: #{encoder_forward.1} parent=0 // pred_check_branch
    %30 = sbr.rel (0) target = $region33
  $region32: #{encoder_forward.1} parent=0 // pred_region
    _
  $region33: #{encoder_forward.1} parent=0 // pred_fallthru
    _
  %p31 = scmp.eq.s32.totalorder 0, 0
  // Predicated region
  $region34: #{encoder_forward.1} parent=0 // pred_check
    %p32 = pneg %p31
  $region35: #{encoder_forward.1} parent=0 // pred_check_branch
    %34 = sbr.rel (%p32) target = $region37
  $region36: #{encoder_forward.1} parent=0 // pred_region
    %35 = vst [vmem:[#allocation2] sm:$0xff] 0.0
    %36 = vst [vmem:[#allocation2 + $0x8] sm:$0xff] 0.0
  $region37: #{encoder_forward.1} parent=0 // pred_fallthru
    _
  %v37 = vld [vmem:[%s0] sm:$0xff]
  %v38 = vld [vmem:[%s0 + $0x8] sm:$0xff]
  %v39 = vld [vmem:[%s0 + $0x10] sm:$0xff]
  %v40 = vld [vmem:[%s0 + $0x18] sm:$0xff]
  %v41 = vld [vmem:[%s0 + $0x20] sm:$0xff]
  %v42 = vld [vmem:[%s0 + $0x28] sm:$0xff]
  %v43 = vld [vmem:[%s0 + $0x30] sm:$0xff]
  %v44 = vld [vmem:[%s0 + $0x38] sm:$0xff]
  %v45 = vld [vmem:[%s0 + $0x40] sm:$0xff]
  %v46 = vld [vmem:[%s0 + $0x48] sm:$0xff]
  %v47 = vld [vmem:[%s0 + $0x50] sm:$0xff]
  %v48 = vld [vmem:[%s0 + $0x58] sm:$0xff]
  %v49 = vld [vmem:[%s0 + $0x60] sm:$0xff]
  %v50 = vld [vmem:[%s0 + $0x68] sm:$0xff]
  %v51 = vld [vmem:[%s0 + $0x70] sm:$0xff]
  %v52 = vld [vmem:[%s0 + $0x78] sm:$0xff]
  %v53 = vld [vmem:[%s1] sm:$0xff]
  %v54 = vld [vmem:[%s1 + $0x8] sm:$0xff]
  %v55 = vld [vmem:[%s1 + $0x10] sm:$0xff]
  %v56 = vld [vmem:[%s1 + $0x18] sm:$0xff]
  %v57 = vld [vmem:[%s3] sm:$0x1]
  %v59 = vlaneseq
  %v60 = vshrl.u32 %v59, 7
  %v61 = vsub.s32 0, %v60
  %v62 = vrot.slane %v57, %v61
  %vm64 = vcmask 261120
  %v66 = vsel %vm64, %v37, 0
  %v69 = vsel %vm64, %v38, 0
  %v72 = vsel %vm64, %v39, 0
  %v75 = vsel %vm64, %v40, 0
  %v78 = vsel %vm64, %v41, 0
  %v81 = vsel %vm64, %v42, 0
  %v84 = vsel %vm64, %v43, 0
  %v87 = vsel %vm64, %v44, 0
  %v90 = vsel %vm64, %v45, 0
  %v93 = vsel %vm64, %v46, 0
  %v96 = vsel %vm64, %v47, 0
  %v99 = vsel %vm64, %v48, 0
  %v102 = vsel %vm64, %v49, 0
  %v105 = vsel %vm64, %v50, 0
  %v108 = vsel %vm64, %v51, 0
  %v111 = vsel %vm64, %v52, 0
  %113 = vmatprep.subr.mxu0 0.0
  %114 = vmatpush1.msra.mxu0 %v53
  %115 = vmatprep.subr.mxu0 0.0
  %116 = vmatpush1.msra.mxu0 %v54
  %117 = vmatprep.subr.mxu0 0.0
  %118 = vmatpush1.msra.mxu0 %v55
  %119 = vmatprep.subr.mxu0 0.0
  %120 = vmatpush1.msra.mxu0 %v56
  %121 = vmatprep.subr.mxu0 0.0
  %122 = vmatpush1.msra.mxu0 0.0
  %123 = vmatprep.subr.mxu0 0.0
  %124 = vmatpush1.msra.mxu0 0.0
  %125 = vmatprep.subr.mxu0 0.0
  %126 = vmatpush1.msra.mxu0 0.0
  %127 = vmatprep.subr.mxu0 0.0
  %128 = vmatpush1.msra.mxu0 0.0
  %129 = vmatprep.subr.mxu0 0.0
  %130 = vmatpush1.msra.mxu0 0.0
  %131 = vmatprep.subr.mxu0 0.0
  %132 = vmatpush1.msra.mxu0 0.0
  %133 = vmatprep.subr.mxu0 0.0
  %134 = vmatpush1.msra.mxu0 0.0
  %135 = vmatprep.subr.mxu0 0.0
  %136 = vmatpush1.msra.mxu0 0.0
  %137 = vmatprep.subr.mxu0 0.0
  %138 = vmatpush1.msra.mxu0 0.0
  %139 = vmatprep.subr.mxu0 0.0
  %140 = vmatpush1.msra.mxu0 0.0
  %141 = vmatprep.subr.mxu0 0.0
  %142 = vmatpush1.msra.mxu0 0.0
  %143 = vmatprep.subr.mxu0 0.0
  %144 = vmatpush1.msra.mxu0 0.0
  %145 = vmatprep.subr.mxu0 0.0
  %146 = vmatpush1.msra.mxu0 0.0
  %147 = vmatprep.subr.mxu0 0.0
  %148 = vmatpush1.msra.mxu0 0.0
  %149 = vmatprep.subr.mxu0 0.0
  %150 = vmatpush1.msra.mxu0 0.0
  %151 = vmatprep.subr.mxu0 0.0
  %152 = vmatpush1.msra.mxu0 0.0
  %153 = vmatprep.subr.mxu0 0.0
  %154 = vmatpush1.msra.mxu0 0.0
  %155 = vmatprep.subr.mxu0 0.0
  %156 = vmatpush1.msra.mxu0 0.0
  %157 = vmatprep.subr.mxu0 0.0
  %158 = vmatpush1.msra.mxu0 0.0
  %159 = vmatprep.subr.mxu0 0.0
  %160 = vmatpush1.msra.mxu0 0.0
  %161 = vmatprep.subr.mxu0 0.0
  %162 = vmatpush1.msra.mxu0 0.0
  %163 = vmatprep.subr.mxu0 0.0
  %164 = vmatpush1.msra.mxu0 0.0
  %165 = vmatprep.subr.mxu0 0.0
  %166 = vmatpush1.msra.mxu0 0.0
  %167 = vmatprep.subr.mxu0 0.0
  %168 = vmatpush1.msra.mxu0 0.0
  %169 = vmatprep.subr.mxu0 0.0
  %170 = vmatpush1.msra.mxu0 0.0
  %171 = vmatprep.subr.mxu0 0.0
  %172 = vmatpush1.msra.mxu0 0.0
  %173 = vmatprep.subr.mxu0 0.0
  %174 = vmatpush1.msra.mxu0 0.0
  %175 = vmatprep.subr.mxu0 0.0
  %176 = vmatpush1.msra.mxu0 0.0
  %177 = vmatprep.mubr.f32.mxu0 0.0
  %178 = vmatmul.mubr.f32.gmra.mrb[0].mxu0 %v66
  %v179 = vpop.f32.mrb[0].mxu0
  %v180 = vadd.f32 %v62, %v179
  %v181 = vpop.f32.mrb[0].mxu0
  %182 = vmatprep.mubr.f32.mxu0 0.0
  %183 = vmatmul.mubr.f32.gmra.mrb[0].mxu0 %v69
  %v184 = vpop.f32.mrb[0].mxu0
  %v185 = vadd.f32 %v62, %v184
  %v186 = vpop.f32.mrb[0].mxu0
  %187 = vmatprep.mubr.f32.mxu0 0.0
  %188 = vmatmul.mubr.f32.gmra.mrb[0].mxu0 %v72
  %v189 = vpop.f32.mrb[0].mxu0
  %v190 = vadd.f32 %v62, %v189
  %v191 = vpop.f32.mrb[0].mxu0
  %192 = vmatprep.mubr.f32.mxu0 0.0
  %193 = vmatmul.mubr.f32.gmra.mrb[0].mxu0 %v75
  %v194 = vpop.f32.mrb[0].mxu0
  %v195 = vadd.f32 %v62, %v194
  %v196 = vpop.f32.mrb[0].mxu0
  %197 = vmatprep.mubr.f32.mxu0 0.0
  %198 = vmatmul.mubr.f32.gmra.mrb[0].mxu0 %v78
  %v199 = vpop.f32.mrb[0].mxu0
  %v200 = vadd.f32 %v62, %v199
  %v201 = vpop.f32.mrb[0].mxu0
  %202 = vmatprep.mubr.f32.mxu0 0.0
  %203 = vmatmul.mubr.f32.gmra.mrb[0].mxu0 %v81
  %v204 = vpop.f32.mrb[0].mxu0
  %v205 = vadd.f32 %v62, %v204
  %v206 = vpop.f32.mrb[0].mxu0
  %207 = vmatprep.mubr.f32.mxu0 0.0
  %208 = vmatmul.mubr.f32.gmra.mrb[0].mxu0 %v84
  %v209 = vpop.f32.mrb[0].mxu0
  %v210 = vadd.f32 %v62, %v209
  %v211 = vpop.f32.mrb[0].mxu0
  %212 = vmatprep.mubr.f32.mxu0 0.0
  %213 = vmatmul.mubr.f32.gmra.mrb[0].mxu0 %v87
  %v214 = vpop.f32.mrb[0].mxu0
  %v215 = vadd.f32 %v62, %v214
  %v216 = vpop.f32.mrb[0].mxu0
  %217 = vmatprep.mubr.f32.mxu0 0.0
  %218 = vmatmul.mubr.f32.gmra.mrb[0].mxu0 %v90
  %v219 = vpop.f32.mrb[0].mxu0
  %v220 = vadd.f32 %v62, %v219
  %v221 = vpop.f32.mrb[0].mxu0
  %222 = vmatprep.mubr.f32.mxu0 0.0
  %223 = vmatmul.mubr.f32.gmra.mrb[0].mxu0 %v93
  %v224 = vpop.f32.mrb[0].mxu0
  %v225 = vadd.f32 %v62, %v224
  %v226 = vpop.f32.mrb[0].mxu0
  %227 = vmatprep.mubr.f32.mxu0 0.0
  %228 = vmatmul.mubr.f32.gmra.mrb[0].mxu0 %v96
  %v229 = vpop.f32.mrb[0].mxu0
  %v230 = vadd.f32 %v62, %v229
  %v231 = vpop.f32.mrb[0].mxu0
  %232 = vmatprep.mubr.f32.mxu0 0.0
  %233 = vmatmul.mubr.f32.gmra.mrb[0].mxu0 %v99
  %v234 = vpop.f32.mrb[0].mxu0
  %v235 = vadd.f32 %v62, %v234
  %v236 = vpop.f32.mrb[0].mxu0
  %237 = vmatprep.mubr.f32.mxu0 0.0
  %238 = vmatmul.mubr.f32.gmra.mrb[0].mxu0 %v102
  %v239 = vpop.f32.mrb[0].mxu0
  %v240 = vadd.f32 %v62, %v239
  %v241 = vpop.f32.mrb[0].mxu0
  %242 = vmatprep.mubr.f32.mxu0 0.0
  %243 = vmatmul.mubr.f32.gmra.mrb[0].mxu0 %v105
  %v244 = vpop.f32.mrb[0].mxu0
  %v245 = vadd.f32 %v62, %v244
  %v246 = vpop.f32.mrb[0].mxu0
  %247 = vmatprep.mubr.f32.mxu0 0.0
  %248 = vmatmul.mubr.f32.gmra.mrb[0].mxu0 %v108
  %v249 = vpop.f32.mrb[0].mxu0
  %v250 = vadd.f32 %v62, %v249
  %v251 = vpop.f32.mrb[0].mxu0
  %252 = vmatprep.mubr.f32.mxu0 0.0
  %253 = vmatmul.mubr.f32.gmra.mrb[0].mxu0 %v111
  %v254 = vpop.f32.mrb[0].mxu0
  %v255 = vadd.f32 %v62, %v254
  %v256 = vpop.f32.mrb[0].mxu0
  %257 = vdwg.mxu0
  %258 = vst [vmem:[%s8] sm:$0xff] %v180
  %259 = vst [vmem:[%s8 + $0x8] sm:$0xff] %v185
  %260 = vst [vmem:[%s8 + $0x10] sm:$0xff] %v190
  %261 = vst [vmem:[%s8 + $0x18] sm:$0xff] %v195
  %262 = vst [vmem:[%s8 + $0x20] sm:$0xff] %v200
  %263 = vst [vmem:[%s8 + $0x28] sm:$0xff] %v205
  %264 = vst [vmem:[%s8 + $0x30] sm:$0xff] %v210
  %265 = vst [vmem:[%s8 + $0x38] sm:$0xff] %v215
  %266 = vst [vmem:[%s8 + $0x40] sm:$0xff] %v220
  %267 = vst [vmem:[%s8 + $0x48] sm:$0xff] %v225
  %268 = vst [vmem:[%s8 + $0x50] sm:$0xff] %v230
  %269 = vst [vmem:[%s8 + $0x58] sm:$0xff] %v235
  %270 = vst [vmem:[%s8 + $0x60] sm:$0xff] %v240
  %271 = vst [vmem:[%s8 + $0x68] sm:$0xff] %v245
  %272 = vst [vmem:[%s8 + $0x70] sm:$0xff] %v250
  %273 = vst [vmem:[%s8 + $0x78] sm:$0xff] %v255
  %v274 = vld [vmem:[%s2] sm:$0xff]
  %v275 = vld [vmem:[%s2 + $0x8] sm:$0xff]
  %v276 = vld [vmem:[%s2 + $0x10] sm:$0xff]
  %v277 = vld [vmem:[%s2 + $0x18] sm:$0xff]
  %v278 = vld [vmem:[%s2 + $0x20] sm:$0xff]
  %v279 = vld [vmem:[%s2 + $0x28] sm:$0xff]
  %v280 = vld [vmem:[%s2 + $0x30] sm:$0xff]
  %v281 = vld [vmem:[%s2 + $0x38] sm:$0xff]
  %v282 = vld [vmem:[%s2 + $0x40] sm:$0xff]
  %v283 = vld [vmem:[%s2 + $0x48] sm:$0xff]
  %v284 = vld [vmem:[%s2 + $0x50] sm:$0xff]
  %v285 = vld [vmem:[%s2 + $0x58] sm:$0xff]
  %v286 = vld [vmem:[%s2 + $0x60] sm:$0xff]
  %v287 = vld [vmem:[%s2 + $0x68] sm:$0xff]
  %v288 = vld [vmem:[%s2 + $0x70] sm:$0xff]
  %v289 = vld [vmem:[%s2 + $0x78] sm:$0xff]
  %v290 = vld [vmem:[#allocation2] sm:$0xff]
  %v291 = vld [vmem:[#allocation2 + $0x8] sm:$0xff]
  %v292 = vld [vmem:[%s8] sm:$0xff]
  %293 = vmatprep.subr.mxu0 0.0
  %294 = vmatpush1.msra.mxu0 %v274
  %295 = vmatprep.subr.mxu0 0.0
  %296 = vmatpush1.msra.mxu0 %v275
  %297 = vmatprep.subr.mxu0 0.0
  %298 = vmatpush1.msra.mxu0 %v276
  %299 = vmatprep.subr.mxu0 0.0
  %300 = vmatpush1.msra.mxu0 %v277
  %301 = vmatprep.subr.mxu0 0.0
  %302 = vmatpush1.msra.mxu0 %v278
  %303 = vmatprep.subr.mxu0 0.0
  %304 = vmatpush1.msra.mxu0 %v279
  %305 = vmatprep.subr.mxu0 0.0
  %306 = vmatpush1.msra.mxu0 %v280
  %307 = vmatprep.subr.mxu0 0.0
  %308 = vmatpush1.msra.mxu0 %v281
  %309 = vmatprep.subr.mxu0 0.0
  %310 = vmatpush1.msra.mxu0 %v282
  %311 = vmatprep.subr.mxu0 0.0
  %312 = vmatpush1.msra.mxu0 %v283
  %313 = vmatprep.subr.mxu0 0.0
  %314 = vmatpush1.msra.mxu0 %v284
  %315 = vmatprep.subr.mxu0 0.0
  %316 = vmatpush1.msra.mxu0 %v285
  %317 = vmatprep.subr.mxu0 0.0
  %318 = vmatpush1.msra.mxu0 %v286
  %319 = vmatprep.subr.mxu0 0.0
  %320 = vmatpush1.msra.mxu0 %v287
  %321 = vmatprep.subr.mxu0 0.0
  %322 = vmatpush1.msra.mxu0 %v288
  %323 = vmatprep.subr.mxu0 0.0
  %324 = vmatpush1.msra.mxu0 %v289
  %325 = vmatprep.subr.mxu0 0.0
  %326 = vmatpush1.msra.mxu0 0.0
  %327 = vmatprep.subr.mxu0 0.0
  %328 = vmatpush1.msra.mxu0 0.0
  %329 = vmatprep.subr.mxu0 0.0
  %330 = vmatpush1.msra.mxu0 0.0
  %331 = vmatprep.subr.mxu0 0.0
  %332 = vmatpush1.msra.mxu0 0.0
  %333 = vmatprep.subr.mxu0 0.0
  %334 = vmatpush1.msra.mxu0 0.0
  %335 = vmatprep.subr.mxu0 0.0
  %336 = vmatpush1.msra.mxu0 0.0
  %337 = vmatprep.subr.mxu0 0.0
  %338 = vmatpush1.msra.mxu0 0.0
  %339 = vmatprep.subr.mxu0 0.0
  %340 = vmatpush1.msra.mxu0 0.0
  %341 = vmatprep.subr.mxu0 0.0
  %342 = vmatpush1.msra.mxu0 0.0
  %343 = vmatprep.subr.mxu0 0.0
  %344 = vmatpush1.msra.mxu0 0.0
  %345 = vmatprep.subr.mxu0 0.0
  %346 = vmatpush1.msra.mxu0 0.0
  %347 = vmatprep.subr.mxu0 0.0
  %348 = vmatpush1.msra.mxu0 0.0
  %349 = vmatprep.subr.mxu0 0.0
  %350 = vmatpush1.msra.mxu0 0.0
  %351 = vmatprep.subr.mxu0 0.0
  %352 = vmatpush1.msra.mxu0 0.0
  %353 = vmatprep.subr.mxu0 0.0
  %354 = vmatpush1.msra.mxu0 0.0
  %355 = vmatprep.subr.mxu0 0.0
  %356 = vmatpush1.msra.mxu0 0.0
  %357 = vmatprep.mubr.f32.mxu0 0.0
  %358 = vmatmul.mubr.f32.gmra.mrb[0].mxu0 %v290
  %v359 = vpop.f32.mrb[0].mxu0
  %v360 = vadd.f32 0.0, %v359
  %v361 = vpop.f32.mrb[0].mxu0
  %362 = vdwg.mxu0
  %v363 = vadd.f32 %v292, %v360
  %v364 = vtanh.pop %v363
  %v365 = vld [vmem:[%s8 + $0x8] sm:$0xff]
  %366 = vmatprep.subr.mxu0 0.0
  %367 = vmatpush1.msra.mxu0 %v274
  %368 = vmatprep.subr.mxu0 0.0
  %369 = vmatpush1.msra.mxu0 %v275
  %370 = vmatprep.subr.mxu0 0.0
  %371 = vmatpush1.msra.mxu0 %v276
  %372 = vmatprep.subr.mxu0 0.0
  %373 = vmatpush1.msra.mxu0 %v277
  %374 = vmatprep.subr.mxu0 0.0
  %375 = vmatpush1.msra.mxu0 %v278
  %376 = vmatprep.subr.mxu0 0.0
  %377 = vmatpush1.msra.mxu0 %v279
  %378 = vmatprep.subr.mxu0 0.0
  %379 = vmatpush1.msra.mxu0 %v280
  %380 = vmatprep.subr.mxu0 0.0
  %381 = vmatpush1.msra.mxu0 %v281
  %382 = vmatprep.subr.mxu0 0.0
  %383 = vmatpush1.msra.mxu0 %v282
  %384 = vmatprep.subr.mxu0 0.0
  %385 = vmatpush1.msra.mxu0 %v283
  %386 = vmatprep.subr.mxu0 0.0
  %387 = vmatpush1.msra.mxu0 %v284
  %388 = vmatprep.subr.mxu0 0.0
  %389 = vmatpush1.msra.mxu0 %v285
  %390 = vmatprep.subr.mxu0 0.0
  %391 = vmatpush1.msra.mxu0 %v286
  %392 = vmatprep.subr.mxu0 0.0
  %393 = vmatpush1.msra.mxu0 %v287
  %394 = vmatprep.subr.mxu0 0.0
  %395 = vmatpush1.msra.mxu0 %v288
  %396 = vmatprep.subr.mxu0 0.0
  %397 = vmatpush1.msra.mxu0 %v289
  %398 = vmatprep.subr.mxu0 0.0
  %399 = vmatpush1.msra.mxu0 0.0
  %400 = vmatprep.subr.mxu0 0.0
  %401 = vmatpush1.msra.mxu0 0.0
  %402 = vmatprep.subr.mxu0 0.0
  %403 = vmatpush1.msra.mxu0 0.0
  %404 = vmatprep.subr.mxu0 0.0
  %405 = vmatpush1.msra.mxu0 0.0
  %406 = vmatprep.subr.mxu0 0.0
  %407 = vmatpush1.msra.mxu0 0.0
  %408 = vmatprep.subr.mxu0 0.0
  %409 = vmatpush1.msra.mxu0 0.0
  %410 = vmatprep.subr.mxu0 0.0
  %411 = vmatpush1.msra.mxu0 0.0
  %412 = vmatprep.subr.mxu0 0.0
  %413 = vmatpush1.msra.mxu0 0.0
  %414 = vmatprep.subr.mxu0 0.0
  %415 = vmatpush1.msra.mxu0 0.0
  %416 = vmatprep.subr.mxu0 0.0
  %417 = vmatpush1.msra.mxu0 0.0
  %418 = vmatprep.subr.mxu0 0.0
  %419 = vmatpush1.msra.mxu0 0.0
  %420 = vmatprep.subr.mxu0 0.0
  %421 = vmatpush1.msra.mxu0 0.0
  %422 = vmatprep.subr.mxu0 0.0
  %423 = vmatpush1.msra.mxu0 0.0
  %424 = vmatprep.subr.mxu0 0.0
  %425 = vmatpush1.msra.mxu0 0.0
  %426 = vmatprep.subr.mxu0 0.0
  %427 = vmatpush1.msra.mxu0 0.0
  %428 = vmatprep.subr.mxu0 0.0
  %429 = vmatpush1.msra.mxu0 0.0
  %430 = vmatprep.mubr.f32.mxu0 0.0
  %431 = vmatmul.mubr.f32.gmra.mrb[0].mxu0 %v291
  %v432 = vpop.f32.mrb[0].mxu0
  %v433 = vadd.f32 0.0, %v432
  %v434 = vpop.f32.mrb[0].mxu0
  %435 = vdwg.mxu0
  %v436 = vadd.f32 %v365, %v433
  %v437 = vtanh.pop %v436
  %438 = vst [vmem:[%s8] sm:$0xff] %v364
  %439 = vst [vmem:[%s8 + $0x8] sm:$0xff] %v437
  %s440 = scalar_lea.vmem %s8, 16
  %v441 = vld [vmem:[%s440] sm:$0xff]
  %442 = vmatprep.subr.mxu0 0.0
  %443 = vmatpush1.msra.mxu0 %v274
  %444 = vmatprep.subr.mxu0 0.0
  %445 = vmatpush1.msra.mxu0 %v275
  %446 = vmatprep.subr.mxu0 0.0
  %447 = vmatpush1.msra.mxu0 %v276
  %448 = vmatprep.subr.mxu0 0.0
  %449 = vmatpush1.msra.mxu0 %v277
  %450 = vmatprep.subr.mxu0 0.0
  %451 = vmatpush1.msra.mxu0 %v278
  %452 = vmatprep.subr.mxu0 0.0
  %453 = vmatpush1.msra.mxu0 %v279
  %454 = vmatprep.subr.mxu0 0.0
  %455 = vmatpush1.msra.mxu0 %v280
  %456 = vmatprep.subr.mxu0 0.0
  %457 = vmatpush1.msra.mxu0 %v281
  %458 = vmatprep.subr.mxu0 0.0
  %459 = vmatpush1.msra.mxu0 %v282
  %460 = vmatprep.subr.mxu0 0.0
  %461 = vmatpush1.msra.mxu0 %v283
  %462 = vmatprep.subr.mxu0 0.0
  %463 = vmatpush1.msra.mxu0 %v284
  %464 = vmatprep.subr.mxu0 0.0
  %465 = vmatpush1.msra.mxu0 %v285
  %466 = vmatprep.subr.mxu0 0.0
  %467 = vmatpush1.msra.mxu0 %v286
  %468 = vmatprep.subr.mxu0 0.0
  %469 = vmatpush1.msra.mxu0 %v287
  %470 = vmatprep.subr.mxu0 0.0
  %471 = vmatpush1.msra.mxu0 %v288
  %472 = vmatprep.subr.mxu0 0.0
  %473 = vmatpush1.msra.mxu0 %v289
  %474 = vmatprep.subr.mxu0 0.0
  %475 = vmatpush1.msra.mxu0 0.0
  %476 = vmatprep.subr.mxu0 0.0
  %477 = vmatpush1.msra.mxu0 0.0
  %478 = vmatprep.subr.mxu0 0.0
  %479 = vmatpush1.msra.mxu0 0.0
  %480 = vmatprep.subr.mxu0 0.0
  %481 = vmatpush1.msra.mxu0 0.0
  %482 = vmatprep.subr.mxu0 0.0
  %483 = vmatpush1.msra.mxu0 0.0
  %484 = vmatprep.subr.mxu0 0.0
  %485 = vmatpush1.msra.mxu0 0.0
  %486 = vmatprep.subr.mxu0 0.0
  %487 = vmatpush1.msra.mxu0 0.0
  %488 = vmatprep.subr.mxu0 0.0
  %489 = vmatpush1.msra.mxu0 0.0
  %490 = vmatprep.subr.mxu0 0.0
  %491 = vmatpush1.msra.mxu0 0.0
  %492 = vmatprep.subr.mxu0 0.0
  %493 = vmatpush1.msra.mxu0 0.0
  %494 = vmatprep.subr.mxu0 0.0
  %495 = vmatpush1.msra.mxu0 0.0
  %496 = vmatprep.subr.mxu0 0.0
  %497 = vmatpush1.msra.mxu0 0.0
  %498 = vmatprep.subr.mxu0 0.0
  %499 = vmatpush1.msra.mxu0 0.0
  %500 = vmatprep.subr.mxu0 0.0
  %501 = vmatpush1.msra.mxu0 0.0
  %502 = vmatprep.subr.mxu0 0.0
  %503 = vmatpush1.msra.mxu0 0.0
  %504 = vmatprep.subr.mxu0 0.0
  %505 = vmatpush1.msra.mxu0 0.0
  %506 = vmatprep.mubr.f32.mxu0 0.0
  %507 = vmatmul.mubr.f32.gmra.mrb[0].mxu0 %v364
  %v508 = vpop.f32.mrb[0].mxu0
  %v509 = vadd.f32 0.0, %v508
  %v510 = vpop.f32.mrb[0].mxu0
  %511 = vdwg.mxu0
  %v512 = vadd.f32 %v441, %v509
  %v513 = vtanh.pop %v512
  %v514 = vld [vmem:[%s440 + $0x8] sm:$0xff]
  %515 = vmatprep.subr.mxu0 0.0
  %516 = vmatpush1.msra.mxu0 %v274
  %517 = vmatprep.subr.mxu0 0.0
  %518 = vmatpush1.msra.mxu0 %v275
  %519 = vmatprep.subr.mxu0 0.0
  %520 = vmatpush1.msra.mxu0 %v276
  %521 = vmatprep.subr.mxu0 0.0
  %522 = vmatpush1.msra.mxu0 %v277
  %523 = vmatprep.subr.mxu0 0.0
  %524 = vmatpush1.msra.mxu0 %v278
  %525 = vmatprep.subr.mxu0 0.0
  %526 = vmatpush1.msra.mxu0 %v279
  %527 = vmatprep.subr.mxu0 0.0
  %528 = vmatpush1.msra.mxu0 %v280
  %529 = vmatprep.subr.mxu0 0.0
  %530 = vmatpush1.msra.mxu0 %v281
  %531 = vmatprep.subr.mxu0 0.0
  %532 = vmatpush1.msra.mxu0 %v282
  %533 = vmatprep.subr.mxu0 0.0
  %534 = vmatpush1.msra.mxu0 %v283
  %535 = vmatprep.subr.mxu0 0.0
  %536 = vmatpush1.msra.mxu0 %v284
  %537 = vmatprep.subr.mxu0 0.0
  %538 = vmatpush1.msra.mxu0 %v285
  %539 = vmatprep.subr.mxu0 0.0
  %540 = vmatpush1.msra.mxu0 %v286
  %541 = vmatprep.subr.mxu0 0.0
  %542 = vmatpush1.msra.mxu0 %v287
  %543 = vmatprep.subr.mxu0 0.0
  %544 = vmatpush1.msra.mxu0 %v288
  %545 = vmatprep.subr.mxu0 0.0
  %546 = vmatpush1.msra.mxu0 %v289
  %547 = vmatprep.subr.mxu0 0.0
  %548 = vmatpush1.msra.mxu0 0.0
  %549 = vmatprep.subr.mxu0 0.0
  %550 = vmatpush1.msra.mxu0 0.0
  %551 = vmatprep.subr.mxu0 0.0
  %552 = vmatpush1.msra.mxu0 0.0
  %553 = vmatprep.subr.mxu0 0.0
  %554 = vmatpush1.msra.mxu0 0.0
  %555 = vmatprep.subr.mxu0 0.0
  %556 = vmatpush1.msra.mxu0 0.0
  %557 = vmatprep.subr.mxu0 0.0
  %558 = vmatpush1.msra.mxu0 0.0
  %559 = vmatprep.subr.mxu0 0.0
  %560 = vmatpush1.msra.mxu0 0.0
  %561 = vmatprep.subr.mxu0 0.0
  %562 = vmatpush1.msra.mxu0 0.0
  %563 = vmatprep.subr.mxu0 0.0
  %564 = vmatpush1.msra.mxu0 0.0
  %565 = vmatprep.subr.mxu0 0.0
  %566 = vmatpush1.msra.mxu0 0.0
  %567 = vmatprep.subr.mxu0 0.0
  %568 = vmatpush1.msra.mxu0 0.0
  %569 = vmatprep.subr.mxu0 0.0
  %570 = vmatpush1.msra.mxu0 0.0
  %571 = vmatprep.subr.mxu0 0.0
  %572 = vmatpush1.msra.mxu0 0.0
  %573 = vmatprep.subr.mxu0 0.0
  %574 = vmatpush1.msra.mxu0 0.0
  %575 = vmatprep.subr.mxu0 0.0
  %576 = vmatpush1.msra.mxu0 0.0
  %577 = vmatprep.subr.mxu0 0.0
  %578 = vmatpush1.msra.mxu0 0.0
  %579 = vmatprep.mubr.f32.mxu0 0.0
  %580 = vmatmul.mubr.f32.gmra.mrb[0].mxu0 %v437
  %v581 = vpop.f32.mrb[0].mxu0
  %v582 = vadd.f32 0.0, %v581
  %v583 = vpop.f32.mrb[0].mxu0
  %584 = vdwg.mxu0
  %v585 = vadd.f32 %v514, %v582
  %v586 = vtanh.pop %v585
  %587 = vst [vmem:[%s440] sm:$0xff] %v513
  %588 = vst [vmem:[%s440 + $0x8] sm:$0xff] %v586
  %s589 = scalar_lea.vmem %s8, 32
  %v590 = vld [vmem:[%s589] sm:$0xff]
  %591 = vmatprep.subr.mxu0 0.0
  %592 = vmatpush1.msra.mxu0 %v274
  %593 = vmatprep.subr.mxu0 0.0
  %594 = vmatpush1.msra.mxu0 %v275
  %595 = vmatprep.subr.mxu0 0.0
  %596 = vmatpush1.msra.mxu0 %v276
  %597 = vmatprep.subr.mxu0 0.0
  %598 = vmatpush1.msra.mxu0 %v277
  %599 = vmatprep.subr.mxu0 0.0
  %600 = vmatpush1.msra.mxu0 %v278
  %601 = vmatprep.subr.mxu0 0.0
  %602 = vmatpush1.msra.mxu0 %v279
  %603 = vmatprep.subr.mxu0 0.0
  %604 = vmatpush1.msra.mxu0 %v280
  %605 = vmatprep.subr.mxu0 0.0
  %606 = vmatpush1.msra.mxu0 %v281
  %607 = vmatprep.subr.mxu0 0.0
  %608 = vmatpush1.msra.mxu0 %v282
  %609 = vmatprep.subr.mxu0 0.0
  %610 = vmatpush1.msra.mxu0 %v283
  %611 = vmatprep.subr.mxu0 0.0
  %612 = vmatpush1.msra.mxu0 %v284
  %613 = vmatprep.subr.mxu0 0.0
  %614 = vmatpush1.msra.mxu0 %v285
  %615 = vmatprep.subr.mxu0 0.0
  %616 = vmatpush1.msra.mxu0 %v286
  %617 = vmatprep.subr.mxu0 0.0
  %618 = vmatpush1.msra.mxu0 %v287
  %619 = vmatprep.subr.mxu0 0.0
  %620 = vmatpush1.msra.mxu0 %v288
  %621 = vmatprep.subr.mxu0 0.0
  %622 = vmatpush1.msra.mxu0 %v289
  %623 = vmatprep.subr.mxu0 0.0
  %624 = vmatpush1.msra.mxu0 0.0
  %625 = vmatprep.subr.mxu0 0.0
  %626 = vmatpush1.msra.mxu0 0.0
  %627 = vmatprep.subr.mxu0 0.0
  %628 = vmatpush1.msra.mxu0 0.0
  %629 = vmatprep.subr.mxu0 0.0
  %630 = vmatpush1.msra.mxu0 0.0
  %631 = vmatprep.subr.mxu0 0.0
  %632 = vmatpush1.msra.mxu0 0.0
  %633 = vmatprep.subr.mxu0 0.0
  %634 = vmatpush1.msra.mxu0 0.0
  %635 = vmatprep.subr.mxu0 0.0
  %636 = vmatpush1.msra.mxu0 0.0
  %637 = vmatprep.subr.mxu0 0.0
  %638 = vmatpush1.msra.mxu0 0.0
  %639 = vmatprep.subr.mxu0 0.0
  %640 = vmatpush1.msra.mxu0 0.0
  %641 = vmatprep.subr.mxu0 0.0
  %642 = vmatpush1.msra.mxu0 0.0
  %643 = vmatprep.subr.mxu0 0.0
  %644 = vmatpush1.msra.mxu0 0.0
  %645 = vmatprep.subr.mxu0 0.0
  %646 = vmatpush1.msra.mxu0 0.0
  %647 = vmatprep.subr.mxu0 0.0
  %648 = vmatpush1.msra.mxu0 0.0
  %649 = vmatprep.subr.mxu0 0.0
  %650 = vmatpush1.msra.mxu0 0.0
  %651 = vmatprep.subr.mxu0 0.0
  %652 = vmatpush1.msra.mxu0 0.0
  %653 = vmatprep.subr.mxu0 0.0
  %654 = vmatpush1.msra.mxu0 0.0
  %655 = vmatprep.mubr.f32.mxu0 0.0
  %656 = vmatmul.mubr.f32.gmra.mrb[0].mxu0 %v513
  %v657 = vpop.f32.mrb[0].mxu0
  %v658 = vadd.f32 0.0, %v657
  %v659 = vpop.f32.mrb[0].mxu0
  %660 = vdwg.mxu0
  %v661 = vadd.f32 %v590, %v658
  %v662 = vtanh.pop %v661
  %v663 = vld [vmem:[%s589 + $0x8] sm:$0xff]
  %664 = vmatprep.subr.mxu0 0.0
  %665 = vmatpush1.msra.mxu0 %v274
  %666 = vmatprep.subr.mxu0 0.0
  %667 = vmatpush1.msra.mxu0 %v275
  %668 = vmatprep.subr.mxu0 0.0
  %669 = vmatpush1.msra.mxu0 %v276
  %670 = vmatprep.subr.mxu0 0.0
  %671 = vmatpush1.msra.mxu0 %v277
  %672 = vmatprep.subr.mxu0 0.0
  %673 = vmatpush1.msra.mxu0 %v278
  %674 = vmatprep.subr.mxu0 0.0
  %675 = vmatpush1.msra.mxu0 %v279
  %676 = vmatprep.subr.mxu0 0.0
  %677 = vmatpush1.msra.mxu0 %v280
  %678 = vmatprep.subr.mxu0 0.0
  %679 = vmatpush1.msra.mxu0 %v281
  %680 = vmatprep.subr.mxu0 0.0
  %681 = vmatpush1.msra.mxu0 %v282
  %682 = vmatprep.subr.mxu0 0.0
  %683 = vmatpush1.msra.mxu0 %v283
  %684 = vmatprep.subr.mxu0 0.0
  %685 = vmatpush1.msra.mxu0 %v284
  %686 = vmatprep.subr.mxu0 0.0
  %687 = vmatpush1.msra.mxu0 %v285
  %688 = vmatprep.subr.mxu0 0.0
  %689 = vmatpush1.msra.mxu0 %v286
  %690 = vmatprep.subr.mxu0 0.0
  %691 = vmatpush1.msra.mxu0 %v287
  %692 = vmatprep.subr.mxu0 0.0
  %693 = vmatpush1.msra.mxu0 %v288
  %694 = vmatprep.subr.mxu0 0.0
  %695 = vmatpush1.msra.mxu0 %v289
  %696 = vmatprep.subr.mxu0 0.0
  %697 = vmatpush1.msra.mxu0 0.0
  %698 = vmatprep.subr.mxu0 0.0
  %699 = vmatpush1.msra.mxu0 0.0
  %700 = vmatprep.subr.mxu0 0.0
  %701 = vmatpush1.msra.mxu0 0.0
  %702 = vmatprep.subr.mxu0 0.0
  %703 = vmatpush1.msra.mxu0 0.0
  %704 = vmatprep.subr.mxu0 0.0
  %705 = vmatpush1.msra.mxu0 0.0
  %706 = vmatprep.subr.mxu0 0.0
  %707 = vmatpush1.msra.mxu0 0.0
  %708 = vmatprep.subr.mxu0 0.0
  %709 = vmatpush1.msra.mxu0 0.0
  %710 = vmatprep.subr.mxu0 0.0
  %711 = vmatpush1.msra.mxu0 0.0
  %712 = vmatprep.subr.mxu0 0.0
  %713 = vmatpush1.msra.mxu0 0.0
  %714 = vmatprep.subr.mxu0 0.0
  %715 = vmatpush1.msra.mxu0 0.0
  %716 = vmatprep.subr.mxu0 0.0
  %717 = vmatpush1.msra.mxu0 0.0
  %718 = vmatprep.subr.mxu0 0.0
  %719 = vmatpush1.msra.mxu0 0.0
  %720 = vmatprep.subr.mxu0 0.0
  %721 = vmatpush1.msra.mxu0 0.0
  %722 = vmatprep.subr.mxu0 0.0
  %723 = vmatpush1.msra.mxu0 0.0
  %724 = vmatprep.subr.mxu0 0.0
  %725 = vmatpush1.msra.mxu0 0.0
  %726 = vmatprep.subr.mxu0 0.0
  %727 = vmatpush1.msra.mxu0 0.0
  %728 = vmatprep.mubr.f32.mxu0 0.0
  %729 = vmatmul.mubr.f32.gmra.mrb[0].mxu0 %v586
  %v730 = vpop.f32.mrb[0].mxu0
  %v731 = vadd.f32 0.0, %v730
  %v732 = vpop.f32.mrb[0].mxu0
  %733 = vdwg.mxu0
  %v734 = vadd.f32 %v663, %v731
  %v735 = vtanh.pop %v734
  %736 = vst [vmem:[%s589] sm:$0xff] %v662
  %737 = vst [vmem:[%s589 + $0x8] sm:$0xff] %v735
  %s738 = scalar_lea.vmem %s8, 48
  %v739 = vld [vmem:[%s738] sm:$0xff]
  %740 = vmatprep.subr.mxu0 0.0
  %741 = vmatpush1.msra.mxu0 %v274
  %742 = vmatprep.subr.mxu0 0.0
  %743 = vmatpush1.msra.mxu0 %v275
  %744 = vmatprep.subr.mxu0 0.0
  %745 = vmatpush1.msra.mxu0 %v276
  %746 = vmatprep.subr.mxu0 0.0
  %747 = vmatpush1.msra.mxu0 %v277
  %748 = vmatprep.subr.mxu0 0.0
  %749 = vmatpush1.msra.mxu0 %v278
  %750 = vmatprep.subr.mxu0 0.0
  %751 = vmatpush1.msra.mxu0 %v279
  %752 = vmatprep.subr.mxu0 0.0
  %753 = vmatpush1.msra.mxu0 %v280
  %754 = vmatprep.subr.mxu0 0.0
  %755 = vmatpush1.msra.mxu0 %v281
  %756 = vmatprep.subr.mxu0 0.0
  %757 = vmatpush1.msra.mxu0 %v282
  %758 = vmatprep.subr.mxu0 0.0
  %759 = vmatpush1.msra.mxu0 %v283
  %760 = vmatprep.subr.mxu0 0.0
  %761 = vmatpush1.msra.mxu0 %v284
  %762 = vmatprep.subr.mxu0 0.0
  %763 = vmatpush1.msra.mxu0 %v285
  %764 = vmatprep.subr.mxu0 0.0
  %765 = vmatpush1.msra.mxu0 %v286
  %766 = vmatprep.subr.mxu0 0.0
  %767 = vmatpush1.msra.mxu0 %v287
  %768 = vmatprep.subr.mxu0 0.0
  %769 = vmatpush1.msra.mxu0 %v288
  %770 = vmatprep.subr.mxu0 0.0
  %771 = vmatpush1.msra.mxu0 %v289
  %772 = vmatprep.subr.mxu0 0.0
  %773 = vmatpush1.msra.mxu0 0.0
  %774 = vmatprep.subr.mxu0 0.0
  %775 = vmatpush1.msra.mxu0 0.0
  %776 = vmatprep.subr.mxu0 0.0
  %777 = vmatpush1.msra.mxu0 0.0
  %778 = vmatprep.subr.mxu0 0.0
  %779 = vmatpush1.msra.mxu0 0.0
  %780 = vmatprep.subr.mxu0 0.0
  %781 = vmatpush1.msra.mxu0 0.0
  %782 = vmatprep.subr.mxu0 0.0
  %783 = vmatpush1.msra.mxu0 0.0
  %784 = vmatprep.subr.mxu0 0.0
  %785 = vmatpush1.msra.mxu0 0.0
  %786 = vmatprep.subr.mxu0 0.0
  %787 = vmatpush1.msra.mxu0 0.0
  %788 = vmatprep.subr.mxu0 0.0
  %789 = vmatpush1.msra.mxu0 0.0
  %790 = vmatprep.subr.mxu0 0.0
  %791 = vmatpush1.msra.mxu0 0.0
  %792 = vmatprep.subr.mxu0 0.0
  %793 = vmatpush1.msra.mxu0 0.0
  %794 = vmatprep.subr.mxu0 0.0
  %795 = vmatpush1.msra.mxu0 0.0
  %796 = vmatprep.subr.mxu0 0.0
  %797 = vmatpush1.msra.mxu0 0.0
  %798 = vmatprep.subr.mxu0 0.0
  %799 = vmatpush1.msra.mxu0 0.0
  %800 = vmatprep.subr.mxu0 0.0
  %801 = vmatpush1.msra.mxu0 0.0
  %802 = vmatprep.subr.mxu0 0.0
  %803 = vmatpush1.msra.mxu0 0.0
  %804 = vmatprep.mubr.f32.mxu0 0.0
  %805 = vmatmul.mubr.f32.gmra.mrb[0].mxu0 %v662
  %v806 = vpop.f32.mrb[0].mxu0
  %v807 = vadd.f32 0.0, %v806
  %v808 = vpop.f32.mrb[0].mxu0
  %809 = vdwg.mxu0
  %v810 = vadd.f32 %v739, %v807
  %v811 = vtanh.pop %v810
  %v812 = vld [vmem:[%s738 + $0x8] sm:$0xff]
  %813 = vmatprep.subr.mxu0 0.0
  %814 = vmatpush1.msra.mxu0 %v274
  %815 = vmatprep.subr.mxu0 0.0
  %816 = vmatpush1.msra.mxu0 %v275
  %817 = vmatprep.subr.mxu0 0.0
  %818 = vmatpush1.msra.mxu0 %v276
  %819 = vmatprep.subr.mxu0 0.0
  %820 = vmatpush1.msra.mxu0 %v277
  %821 = vmatprep.subr.mxu0 0.0
  %822 = vmatpush1.msra.mxu0 %v278
  %823 = vmatprep.subr.mxu0 0.0
  %824 = vmatpush1.msra.mxu0 %v279
  %825 = vmatprep.subr.mxu0 0.0
  %826 = vmatpush1.msra.mxu0 %v280
  %827 = vmatprep.subr.mxu0 0.0
  %828 = vmatpush1.msra.mxu0 %v281
  %829 = vmatprep.subr.mxu0 0.0
  %830 = vmatpush1.msra.mxu0 %v282
  %831 = vmatprep.subr.mxu0 0.0
  %832 = vmatpush1.msra.mxu0 %v283
  %833 = vmatprep.subr.mxu0 0.0
  %834 = vmatpush1.msra.mxu0 %v284
  %835 = vmatprep.subr.mxu0 0.0
  %836 = vmatpush1.msra.mxu0 %v285
  %837 = vmatprep.subr.mxu0 0.0
  %838 = vmatpush1.msra.mxu0 %v286
  %839 = vmatprep.subr.mxu0 0.0
  %840 = vmatpush1.msra.mxu0 %v287
  %841 = vmatprep.subr.mxu0 0.0
  %842 = vmatpush1.msra.mxu0 %v288
  %843 = vmatprep.subr.mxu0 0.0
  %844 = vmatpush1.msra.mxu0 %v289
  %845 = vmatprep.subr.mxu0 0.0
  %846 = vmatpush1.msra.mxu0 0.0
  %847 = vmatprep.subr.mxu0 0.0
  %848 = vmatpush1.msra.mxu0 0.0
  %849 = vmatprep.subr.mxu0 0.0
  %850 = vmatpush1.msra.mxu0 0.0
  %851 = vmatprep.subr.mxu0 0.0
  %852 = vmatpush1.msra.mxu0 0.0
  %853 = vmatprep.subr.mxu0 0.0
  %854 = vmatpush1.msra.mxu0 0.0
  %855 = vmatprep.subr.mxu0 0.0
  %856 = vmatpush1.msra.mxu0 0.0
  %857 = vmatprep.subr.mxu0 0.0
  %858 = vmatpush1.msra.mxu0 0.0
  %859 = vmatprep.subr.mxu0 0.0
  %860 = vmatpush1.msra.mxu0 0.0
  %861 = vmatprep.subr.mxu0 0.0
  %862 = vmatpush1.msra.mxu0 0.0
  %863 = vmatprep.subr.mxu0 0.0
  %864 = vmatpush1.msra.mxu0 0.0
  %865 = vmatprep.subr.mxu0 0.0
  %866 = vmatpush1.msra.mxu0 0.0
  %867 = vmatprep.subr.mxu0 0.0
  %868 = vmatpush1.msra.mxu0 0.0
  %869 = vmatprep.subr.mxu0 0.0
  %870 = vmatpush1.msra.mxu0 0.0
  %871 = vmatprep.subr.mxu0 0.0
  %872 = vmatpush1.msra.mxu0 0.0
  %873 = vmatprep.subr.mxu0 0.0
  %874 = vmatpush1.msra.mxu0 0.0
  %875 = vmatprep.subr.mxu0 0.0
  %876 = vmatpush1.msra.mxu0 0.0
  %877 = vmatprep.mubr.f32.mxu0 0.0
  %878 = vmatmul.mubr.f32.gmra.mrb[0].mxu0 %v735
  %v879 = vpop.f32.mrb[0].mxu0
  %v880 = vadd.f32 0.0, %v879
  %v881 = vpop.f32.mrb[0].mxu0
  %882 = vdwg.mxu0
  %v883 = vadd.f32 %v812, %v880
  %v884 = vtanh.pop %v883
  %885 = vst [vmem:[%s738] sm:$0xff] %v811
  %886 = vst [vmem:[%s738 + $0x8] sm:$0xff] %v884
  %s887 = scalar_lea.vmem %s8, 64
  %v888 = vld [vmem:[%s887] sm:$0xff]
  %889 = vmatprep.subr.mxu0 0.0
  %890 = vmatpush1.msra.mxu0 %v274
  %891 = vmatprep.subr.mxu0 0.0
  %892 = vmatpush1.msra.mxu0 %v275
  %893 = vmatprep.subr.mxu0 0.0
  %894 = vmatpush1.msra.mxu0 %v276
  %895 = vmatprep.subr.mxu0 0.0
  %896 = vmatpush1.msra.mxu0 %v277
  %897 = vmatprep.subr.mxu0 0.0
  %898 = vmatpush1.msra.mxu0 %v278
  %899 = vmatprep.subr.mxu0 0.0
  %900 = vmatpush1.msra.mxu0 %v279
  %901 = vmatprep.subr.mxu0 0.0
  %902 = vmatpush1.msra.mxu0 %v280
  %903 = vmatprep.subr.mxu0 0.0
  %904 = vmatpush1.msra.mxu0 %v281
  %905 = vmatprep.subr.mxu0 0.0
  %906 = vmatpush1.msra.mxu0 %v282
  %907 = vmatprep.subr.mxu0 0.0
  %908 = vmatpush1.msra.mxu0 %v283
  %909 = vmatprep.subr.mxu0 0.0
  %910 = vmatpush1.msra.mxu0 %v284
  %911 = vmatprep.subr.mxu0 0.0
  %912 = vmatpush1.msra.mxu0 %v285
  %913 = vmatprep.subr.mxu0 0.0
  %914 = vmatpush1.msra.mxu0 %v286
  %915 = vmatprep.subr.mxu0 0.0
  %916 = vmatpush1.msra.mxu0 %v287
  %917 = vmatprep.subr.mxu0 0.0
  %918 = vmatpush1.msra.mxu0 %v288
  %919 = vmatprep.subr.mxu0 0.0
  %920 = vmatpush1.msra.mxu0 %v289
  %921 = vmatprep.subr.mxu0 0.0
  %922 = vmatpush1.msra.mxu0 0.0
  %923 = vmatprep.subr.mxu0 0.0
  %924 = vmatpush1.msra.mxu0 0.0
  %925 = vmatprep.subr.mxu0 0.0
  %926 = vmatpush1.msra.mxu0 0.0
  %927 = vmatprep.subr.mxu0 0.0
  %928 = vmatpush1.msra.mxu0 0.0
  %929 = vmatprep.subr.mxu0 0.0
  %930 = vmatpush1.msra.mxu0 0.0
  %931 = vmatprep.subr.mxu0 0.0
  %932 = vmatpush1.msra.mxu0 0.0
  %933 = vmatprep.subr.mxu0 0.0
  %934 = vmatpush1.msra.mxu0 0.0
  %935 = vmatprep.subr.mxu0 0.0
  %936 = vmatpush1.msra.mxu0 0.0
  %937 = vmatprep.subr.mxu0 0.0
  %938 = vmatpush1.msra.mxu0 0.0
  %939 = vmatprep.subr.mxu0 0.0
  %940 = vmatpush1.msra.mxu0 0.0
  %941 = vmatprep.subr.mxu0 0.0
  %942 = vmatpush1.msra.mxu0 0.0
  %943 = vmatprep.subr.mxu0 0.0
  %944 = vmatpush1.msra.mxu0 0.0
  %945 = vmatprep.subr.mxu0 0.0
  %946 = vmatpush1.msra.mxu0 0.0
  %947 = vmatprep.subr.mxu0 0.0
  %948 = vmatpush1.msra.mxu0 0.0
  %949 = vmatprep.subr.mxu0 0.0
  %950 = vmatpush1.msra.mxu0 0.0
  %951 = vmatprep.subr.mxu0 0.0
  %952 = vmatpush1.msra.mxu0 0.0
  %953 = vmatprep.mubr.f32.mxu0 0.0
  %954 = vmatmul.mubr.f32.gmra.mrb[0].mxu0 %v811
  %v955 = vpop.f32.mrb[0].mxu0
  %v956 = vadd.f32 0.0, %v955
  %v957 = vpop.f32.mrb[0].mxu0
  %958 = vdwg.mxu0
  %v959 = vadd.f32 %v888, %v956
  %v960 = vtanh.pop %v959
  %v961 = vld [vmem:[%s887 + $0x8] sm:$0xff]
  %962 = vmatprep.subr.mxu0 0.0
  %963 = vmatpush1.msra.mxu0 %v274
  %964 = vmatprep.subr.mxu0 0.0
  %965 = vmatpush1.msra.mxu0 %v275
  %966 = vmatprep.subr.mxu0 0.0
  %967 = vmatpush1.msra.mxu0 %v276
  %968 = vmatprep.subr.mxu0 0.0
  %969 = vmatpush1.msra.mxu0 %v277
  %970 = vmatprep.subr.mxu0 0.0
  %971 = vmatpush1.msra.mxu0 %v278
  %972 = vmatprep.subr.mxu0 0.0
  %973 = vmatpush1.msra.mxu0 %v279
  %974 = vmatprep.subr.mxu0 0.0
  %975 = vmatpush1.msra.mxu0 %v280
  %976 = vmatprep.subr.mxu0 0.0
  %977 = vmatpush1.msra.mxu0 %v281
  %978 = vmatprep.subr.mxu0 0.0
  %979 = vmatpush1.msra.mxu0 %v282
  %980 = vmatprep.subr.mxu0 0.0
  %981 = vmatpush1.msra.mxu0 %v283
  %982 = vmatprep.subr.mxu0 0.0
  %983 = vmatpush1.msra.mxu0 %v284
  %984 = vmatprep.subr.mxu0 0.0
  %985 = vmatpush1.msra.mxu0 %v285
  %986 = vmatprep.subr.mxu0 0.0
  %987 = vmatpush1.msra.mxu0 %v286
  %988 = vmatprep.subr.mxu0 0.0
  %989 = vmatpush1.msra.mxu0 %v287
  %990 = vmatprep.subr.mxu0 0.0
  %991 = vmatpush1.msra.mxu0 %v288
  %992 = vmatprep.subr.mxu0 0.0
  %993 = vmatpush1.msra.mxu0 %v289
  %994 = vmatprep.subr.mxu0 0.0
  %995 = vmatpush1.msra.mxu0 0.0
  %996 = vmatprep.subr.mxu0 0.0
  %997 = vmatpush1.msra.mxu0 0.0
  %998 = vmatprep.subr.mxu0 0.0
  %999 = vmatpush1.msra.mxu0 0.0
  %1000 = vmatprep.subr.mxu0 0.0
  %1001 = vmatpush1.msra.mxu0 0.0
  %1002 = vmatprep.subr.mxu0 0.0
  %1003 = vmatpush1.msra.mxu0 0.0
  %1004 = vmatprep.subr.mxu0 0.0
  %1005 = vmatpush1.msra.mxu0 0.0
  %1006 = vmatprep.subr.mxu0 0.0
  %1007 = vmatpush1.msra.mxu0 0.0
  %1008 = vmatprep.subr.mxu0 0.0
  %1009 = vmatpush1.msra.mxu0 0.0
  %1010 = vmatprep.subr.mxu0 0.0
  %1011 = vmatpush1.msra.mxu0 0.0
  %1012 = vmatprep.subr.mxu0 0.0
  %1013 = vmatpush1.msra.mxu0 0.0
  %1014 = vmatprep.subr.mxu0 0.0
  %1015 = vmatpush1.msra.mxu0 0.0
  %1016 = vmatprep.subr.mxu0 0.0
  %1017 = vmatpush1.msra.mxu0 0.0
  %1018 = vmatprep.subr.mxu0 0.0
  %1019 = vmatpush1.msra.mxu0 0.0
  %1020 = vmatprep.subr.mxu0 0.0
  %1021 = vmatpush1.msra.mxu0 0.0
  %1022 = vmatprep.subr.mxu0 0.0
  %1023 = vmatpush1.msra.mxu0 0.0
  %1024 = vmatprep.subr.mxu0 0.0
  %1025 = vmatpush1.msra.mxu0 0.0
  %1026 = vmatprep.mubr.f32.mxu0 0.0
  %1027 = vmatmul.mubr.f32.gmra.mrb[0].mxu0 %v884
  %v1028 = vpop.f32.mrb[0].mxu0
  %v1029 = vadd.f32 0.0, %v1028
  %v1030 = vpop.f32.mrb[0].mxu0
  %1031 = vdwg.mxu0
  %v1032 = vadd.f32 %v961, %v1029
  %v1033 = vtanh.pop %v1032
  %1034 = vst [vmem:[%s887] sm:$0xff] %v960
  %1035 = vst [vmem:[%s887 + $0x8] sm:$0xff] %v1033
  %s1036 = scalar_lea.vmem %s8, 80
  %v1037 = vld [vmem:[%s1036] sm:$0xff]
  %1038 = vmatprep.subr.mxu0 0.0
  %1039 = vmatpush1.msra.mxu0 %v274
  %1040 = vmatprep.subr.mxu0 0.0
  %1041 = vmatpush1.msra.mxu0 %v275
  %1042 = vmatprep.subr.mxu0 0.0
  %1043 = vmatpush1.msra.mxu0 %v276
  %1044 = vmatprep.subr.mxu0 0.0
  %1045 = vmatpush1.msra.mxu0 %v277
  %1046 = vmatprep.subr.mxu0 0.0
  %1047 = vmatpush1.msra.mxu0 %v278
  %1048 = vmatprep.subr.mxu0 0.0
  %1049 = vmatpush1.msra.mxu0 %v279
  %1050 = vmatprep.subr.mxu0 0.0
  %1051 = vmatpush1.msra.mxu0 %v280
  %1052 = vmatprep.subr.mxu0 0.0
  %1053 = vmatpush1.msra.mxu0 %v281
  %1054 = vmatprep.subr.mxu0 0.0
  %1055 = vmatpush1.msra.mxu0 %v282
  %1056 = vmatprep.subr.mxu0 0.0
  %1057 = vmatpush1.msra.mxu0 %v283
  %1058 = vmatprep.subr.mxu0 0.0
  %1059 = vmatpush1.msra.mxu0 %v284
  %1060 = vmatprep.subr.mxu0 0.0
  %1061 = vmatpush1.msra.mxu0 %v285
  %1062 = vmatprep.subr.mxu0 0.0
  %1063 = vmatpush1.msra.mxu0 %v286
  %1064 = vmatprep.subr.mxu0 0.0
  %1065 = vmatpush1.msra.mxu0 %v287
  %1066 = vmatprep.subr.mxu0 0.0
  %1067 = vmatpush1.msra.mxu0 %v288
  %1068 = vmatprep.subr.mxu0 0.0
  %1069 = vmatpush1.msra.mxu0 %v289
  %1070 = vmatprep.subr.mxu0 0.0
  %1071 = vmatpush1.msra.mxu0 0.0
  %1072 = vmatprep.subr.mxu0 0.0
  %1073 = vmatpush1.msra.mxu0 0.0
  %1074 = vmatprep.subr.mxu0 0.0
  %1075 = vmatpush1.msra.mxu0 0.0
  %1076 = vmatprep.subr.mxu0 0.0
  %1077 = vmatpush1.msra.mxu0 0.0
  %1078 = vmatprep.subr.mxu0 0.0
  %1079 = vmatpush1.msra.mxu0 0.0
  %1080 = vmatprep.subr.mxu0 0.0
  %1081 = vmatpush1.msra.mxu0 0.0
  %1082 = vmatprep.subr.mxu0 0.0
  %1083 = vmatpush1.msra.mxu0 0.0
  %1084 = vmatprep.subr.mxu0 0.0
  %1085 = vmatpush1.msra.mxu0 0.0
  %1086 = vmatprep.subr.mxu0 0.0
  %1087 = vmatpush1.msra.mxu0 0.0
  %1088 = vmatprep.subr.mxu0 0.0
  %1089 = vmatpush1.msra.mxu0 0.0
  %1090 = vmatprep.subr.mxu0 0.0
  %1091 = vmatpush1.msra.mxu0 0.0
  %1092 = vmatprep.subr.mxu0 0.0
  %1093 = vmatpush1.msra.mxu0 0.0
  %1094 = vmatprep.subr.mxu0 0.0
  %1095 = vmatpush1.msra.mxu0 0.0
  %1096 = vmatprep.subr.mxu0 0.0
  %1097 = vmatpush1.msra.mxu0 0.0
  %1098 = vmatprep.subr.mxu0 0.0
  %1099 = vmatpush1.msra.mxu0 0.0
  %1100 = vmatprep.subr.mxu0 0.0
  %1101 = vmatpush1.msra.mxu0 0.0
  %1102 = vmatprep.mubr.f32.mxu0 0.0
  %1103 = vmatmul.mubr.f32.gmra.mrb[0].mxu0 %v960
  %v1104 = vpop.f32.mrb[0].mxu0
  %v1105 = vadd.f32 0.0, %v1104
  %v1106 = vpop.f32.mrb[0].mxu0
  %1107 = vdwg.mxu0
  %v1108 = vadd.f32 %v1037, %v1105
  %v1109 = vtanh.pop %v1108
  %v1110 = vld [vmem:[%s1036 + $0x8] sm:$0xff]
  %1111 = vmatprep.subr.mxu0 0.0
  %1112 = vmatpush1.msra.mxu0 %v274
  %1113 = vmatprep.subr.mxu0 0.0
  %1114 = vmatpush1.msra.mxu0 %v275
  %1115 = vmatprep.subr.mxu0 0.0
  %1116 = vmatpush1.msra.mxu0 %v276
  %1117 = vmatprep.subr.mxu0 0.0
  %1118 = vmatpush1.msra.mxu0 %v277
  %1119 = vmatprep.subr.mxu0 0.0
  %1120 = vmatpush1.msra.mxu0 %v278
  %1121 = vmatprep.subr.mxu0 0.0
  %1122 = vmatpush1.msra.mxu0 %v279
  %1123 = vmatprep.subr.mxu0 0.0
  %1124 = vmatpush1.msra.mxu0 %v280
  %1125 = vmatprep.subr.mxu0 0.0
  %1126 = vmatpush1.msra.mxu0 %v281
  %1127 = vmatprep.subr.mxu0 0.0
  %1128 = vmatpush1.msra.mxu0 %v282
  %1129 = vmatprep.subr.mxu0 0.0
  %1130 = vmatpush1.msra.mxu0 %v283
  %1131 = vmatprep.subr.mxu0 0.0
  %1132 = vmatpush1.msra.mxu0 %v284
  %1133 = vmatprep.subr.mxu0 0.0
  %1134 = vmatpush1.msra.mxu0 %v285
  %1135 = vmatprep.subr.mxu0 0.0
  %1136 = vmatpush1.msra.mxu0 %v286
  %1137 = vmatprep.subr.mxu0 0.0
  %1138 = vmatpush1.msra.mxu0 %v287
  %1139 = vmatprep.subr.mxu0 0.0
  %1140 = vmatpush1.msra.mxu0 %v288
  %1141 = vmatprep.subr.mxu0 0.0
  %1142 = vmatpush1.msra.mxu0 %v289
  %1143 = vmatprep.subr.mxu0 0.0
  %1144 = vmatpush1.msra.mxu0 0.0
  %1145 = vmatprep.subr.mxu0 0.0
  %1146 = vmatpush1.msra.mxu0 0.0
  %1147 = vmatprep.subr.mxu0 0.0
  %1148 = vmatpush1.msra.mxu0 0.0
  %1149 = vmatprep.subr.mxu0 0.0
  %1150 = vmatpush1.msra.mxu0 0.0
  %1151 = vmatprep.subr.mxu0 0.0
  %1152 = vmatpush1.msra.mxu0 0.0
  %1153 = vmatprep.subr.mxu0 0.0
  %1154 = vmatpush1.msra.mxu0 0.0
  %1155 = vmatprep.subr.mxu0 0.0
  %1156 = vmatpush1.msra.mxu0 0.0
  %1157 = vmatprep.subr.mxu0 0.0
  %1158 = vmatpush1.msra.mxu0 0.0
  %1159 = vmatprep.subr.mxu0 0.0
  %1160 = vmatpush1.msra.mxu0 0.0
  %1161 = vmatprep.subr.mxu0 0.0
  %1162 = vmatpush1.msra.mxu0 0.0
  %1163 = vmatprep.subr.mxu0 0.0
  %1164 = vmatpush1.msra.mxu0 0.0
  %1165 = vmatprep.subr.mxu0 0.0
  %1166 = vmatpush1.msra.mxu0 0.0
  %1167 = vmatprep.subr.mxu0 0.0
  %1168 = vmatpush1.msra.mxu0 0.0
  %1169 = vmatprep.subr.mxu0 0.0
  %1170 = vmatpush1.msra.mxu0 0.0
  %1171 = vmatprep.subr.mxu0 0.0
  %1172 = vmatpush1.msra.mxu0 0.0
  %1173 = vmatprep.subr.mxu0 0.0
  %1174 = vmatpush1.msra.mxu0 0.0
  %1175 = vmatprep.mubr.f32.mxu0 0.0
  %1176 = vmatmul.mubr.f32.gmra.mrb[0].mxu0 %v1033
  %v1177 = vpop.f32.mrb[0].mxu0
  %v1178 = vadd.f32 0.0, %v1177
  %v1179 = vpop.f32.mrb[0].mxu0
  %1180 = vdwg.mxu0
  %v1181 = vadd.f32 %v1110, %v1178
  %v1182 = vtanh.pop %v1181
  %1183 = vst [vmem:[%s1036] sm:$0xff] %v1109
  %1184 = vst [vmem:[%s1036 + $0x8] sm:$0xff] %v1182
  %s1185 = scalar_lea.vmem %s8, 96
  %v1186 = vld [vmem:[%s1185] sm:$0xff]
  %1187 = vmatprep.subr.mxu0 0.0
  %1188 = vmatpush1.msra.mxu0 %v274
  %1189 = vmatprep.subr.mxu0 0.0
  %1190 = vmatpush1.msra.mxu0 %v275
  %1191 = vmatprep.subr.mxu0 0.0
  %1192 = vmatpush1.msra.mxu0 %v276
  %1193 = vmatprep.subr.mxu0 0.0
  %1194 = vmatpush1.msra.mxu0 %v277
  %1195 = vmatprep.subr.mxu0 0.0
  %1196 = vmatpush1.msra.mxu0 %v278
  %1197 = vmatprep.subr.mxu0 0.0
  %1198 = vmatpush1.msra.mxu0 %v279
  %1199 = vmatprep.subr.mxu0 0.0
  %1200 = vmatpush1.msra.mxu0 %v280
  %1201 = vmatprep.subr.mxu0 0.0
  %1202 = vmatpush1.msra.mxu0 %v281
  %1203 = vmatprep.subr.mxu0 0.0
  %1204 = vmatpush1.msra.mxu0 %v282
  %1205 = vmatprep.subr.mxu0 0.0
  %1206 = vmatpush1.msra.mxu0 %v283
  %1207 = vmatprep.subr.mxu0 0.0
  %1208 = vmatpush1.msra.mxu0 %v284
  %1209 = vmatprep.subr.mxu0 0.0
  %1210 = vmatpush1.msra.mxu0 %v285
  %1211 = vmatprep.subr.mxu0 0.0
  %1212 = vmatpush1.msra.mxu0 %v286
  %1213 = vmatprep.subr.mxu0 0.0
  %1214 = vmatpush1.msra.mxu0 %v287
  %1215 = vmatprep.subr.mxu0 0.0
  %1216 = vmatpush1.msra.mxu0 %v288
  %1217 = vmatprep.subr.mxu0 0.0
  %1218 = vmatpush1.msra.mxu0 %v289
  %1219 = vmatprep.subr.mxu0 0.0
  %1220 = vmatpush1.msra.mxu0 0.0
  %1221 = vmatprep.subr.mxu0 0.0
  %1222 = vmatpush1.msra.mxu0 0.0
  %1223 = vmatprep.subr.mxu0 0.0
  %1224 = vmatpush1.msra.mxu0 0.0
  %1225 = vmatprep.subr.mxu0 0.0
  %1226 = vmatpush1.msra.mxu0 0.0
  %1227 = vmatprep.subr.mxu0 0.0
  %1228 = vmatpush1.msra.mxu0 0.0
  %1229 = vmatprep.subr.mxu0 0.0
  %1230 = vmatpush1.msra.mxu0 0.0
  %1231 = vmatprep.subr.mxu0 0.0
  %1232 = vmatpush1.msra.mxu0 0.0
  %1233 = vmatprep.subr.mxu0 0.0
  %1234 = vmatpush1.msra.mxu0 0.0
  %1235 = vmatprep.subr.mxu0 0.0
  %1236 = vmatpush1.msra.mxu0 0.0
  %1237 = vmatprep.subr.mxu0 0.0
  %1238 = vmatpush1.msra.mxu0 0.0
  %1239 = vmatprep.subr.mxu0 0.0
  %1240 = vmatpush1.msra.mxu0 0.0
  %1241 = vmatprep.subr.mxu0 0.0
  %1242 = vmatpush1.msra.mxu0 0.0
  %1243 = vmatprep.subr.mxu0 0.0
  %1244 = vmatpush1.msra.mxu0 0.0
  %1245 = vmatprep.subr.mxu0 0.0
  %1246 = vmatpush1.msra.mxu0 0.0
  %1247 = vmatprep.subr.mxu0 0.0
  %1248 = vmatpush1.msra.mxu0 0.0
  %1249 = vmatprep.subr.mxu0 0.0
  %1250 = vmatpush1.msra.mxu0 0.0
  %1251 = vmatprep.mubr.f32.mxu0 0.0
  %1252 = vmatmul.mubr.f32.gmra.mrb[0].mxu0 %v1109
  %v1253 = vpop.f32.mrb[0].mxu0
  %v1254 = vadd.f32 0.0, %v1253
  %v1255 = vpop.f32.mrb[0].mxu0
  %1256 = vdwg.mxu0
  %v1257 = vadd.f32 %v1186, %v1254
  %v1258 = vtanh.pop %v1257
  %v1259 = vld [vmem:[%s1185 + $0x8] sm:$0xff]
  %1260 = vmatprep.subr.mxu0 0.0
  %1261 = vmatpush1.msra.mxu0 %v274
  %1262 = vmatprep.subr.mxu0 0.0
  %1263 = vmatpush1.msra.mxu0 %v275
  %1264 = vmatprep.subr.mxu0 0.0
  %1265 = vmatpush1.msra.mxu0 %v276
  %1266 = vmatprep.subr.mxu0 0.0
  %1267 = vmatpush1.msra.mxu0 %v277
  %1268 = vmatprep.subr.mxu0 0.0
  %1269 = vmatpush1.msra.mxu0 %v278
  %1270 = vmatprep.subr.mxu0 0.0
  %1271 = vmatpush1.msra.mxu0 %v279
  %1272 = vmatprep.subr.mxu0 0.0
  %1273 = vmatpush1.msra.mxu0 %v280
  %1274 = vmatprep.subr.mxu0 0.0
  %1275 = vmatpush1.msra.mxu0 %v281
  %1276 = vmatprep.subr.mxu0 0.0
  %1277 = vmatpush1.msra.mxu0 %v282
  %1278 = vmatprep.subr.mxu0 0.0
  %1279 = vmatpush1.msra.mxu0 %v283
  %1280 = vmatprep.subr.mxu0 0.0
  %1281 = vmatpush1.msra.mxu0 %v284
  %1282 = vmatprep.subr.mxu0 0.0
  %1283 = vmatpush1.msra.mxu0 %v285
  %1284 = vmatprep.subr.mxu0 0.0
  %1285 = vmatpush1.msra.mxu0 %v286
  %1286 = vmatprep.subr.mxu0 0.0
  %1287 = vmatpush1.msra.mxu0 %v287
  %1288 = vmatprep.subr.mxu0 0.0
  %1289 = vmatpush1.msra.mxu0 %v288
  %1290 = vmatprep.subr.mxu0 0.0
  %1291 = vmatpush1.msra.mxu0 %v289
  %1292 = vmatprep.subr.mxu0 0.0
  %1293 = vmatpush1.msra.mxu0 0.0
  %1294 = vmatprep.subr.mxu0 0.0
  %1295 = vmatpush1.msra.mxu0 0.0
  %1296 = vmatprep.subr.mxu0 0.0
  %1297 = vmatpush1.msra.mxu0 0.0
  %1298 = vmatprep.subr.mxu0 0.0
  %1299 = vmatpush1.msra.mxu0 0.0
  %1300 = vmatprep.subr.mxu0 0.0
  %1301 = vmatpush1.msra.mxu0 0.0
  %1302 = vmatprep.subr.mxu0 0.0
  %1303 = vmatpush1.msra.mxu0 0.0
  %1304 = vmatprep.subr.mxu0 0.0
  %1305 = vmatpush1.msra.mxu0 0.0
  %1306 = vmatprep.subr.mxu0 0.0
  %1307 = vmatpush1.msra.mxu0 0.0
  %1308 = vmatprep.subr.mxu0 0.0
  %1309 = vmatpush1.msra.mxu0 0.0
  %1310 = vmatprep.subr.mxu0 0.0
  %1311 = vmatpush1.msra.mxu0 0.0
  %1312 = vmatprep.subr.mxu0 0.0
  %1313 = vmatpush1.msra.mxu0 0.0
  %1314 = vmatprep.subr.mxu0 0.0
  %1315 = vmatpush1.msra.mxu0 0.0
  %1316 = vmatprep.subr.mxu0 0.0
  %1317 = vmatpush1.msra.mxu0 0.0
  %1318 = vmatprep.subr.mxu0 0.0
  %1319 = vmatpush1.msra.mxu0 0.0
  %1320 = vmatprep.subr.mxu0 0.0
  %1321 = vmatpush1.msra.mxu0 0.0
  %1322 = vmatprep.subr.mxu0 0.0
  %1323 = vmatpush1.msra.mxu0 0.0
  %1324 = vmatprep.mubr.f32.mxu0 0.0
  %1325 = vmatmul.mubr.f32.gmra.mrb[0].mxu0 %v1182
  %v1326 = vpop.f32.mrb[0].mxu0
  %v1327 = vadd.f32 0.0, %v1326
  %v1328 = vpop.f32.mrb[0].mxu0
  %1329 = vdwg.mxu0
  %v1330 = vadd.f32 %v1259, %v1327
  %v1331 = vtanh.pop %v1330
  %1332 = vst [vmem:[%s1185] sm:$0xff] %v1258
  %1333 = vst [vmem:[%s1185 + $0x8] sm:$0xff] %v1331
  %s1334 = scalar_lea.vmem %s8, 112
  %v1335 = vld [vmem:[%s1334] sm:$0xff]
  %1336 = vmatprep.subr.mxu0 0.0
  %1337 = vmatpush1.msra.mxu0 %v274
  %1338 = vmatprep.subr.mxu0 0.0
  %1339 = vmatpush1.msra.mxu0 %v275
  %1340 = vmatprep.subr.mxu0 0.0
  %1341 = vmatpush1.msra.mxu0 %v276
  %1342 = vmatprep.subr.mxu0 0.0
  %1343 = vmatpush1.msra.mxu0 %v277
  %1344 = vmatprep.subr.mxu0 0.0
  %1345 = vmatpush1.msra.mxu0 %v278
  %1346 = vmatprep.subr.mxu0 0.0
  %1347 = vmatpush1.msra.mxu0 %v279
  %1348 = vmatprep.subr.mxu0 0.0
  %1349 = vmatpush1.msra.mxu0 %v280
  %1350 = vmatprep.subr.mxu0 0.0
  %1351 = vmatpush1.msra.mxu0 %v281
  %1352 = vmatprep.subr.mxu0 0.0
  %1353 = vmatpush1.msra.mxu0 %v282
  %1354 = vmatprep.subr.mxu0 0.0
  %1355 = vmatpush1.msra.mxu0 %v283
  %1356 = vmatprep.subr.mxu0 0.0
  %1357 = vmatpush1.msra.mxu0 %v284
  %1358 = vmatprep.subr.mxu0 0.0
  %1359 = vmatpush1.msra.mxu0 %v285
  %1360 = vmatprep.subr.mxu0 0.0
  %1361 = vmatpush1.msra.mxu0 %v286
  %1362 = vmatprep.subr.mxu0 0.0
  %1363 = vmatpush1.msra.mxu0 %v287
  %1364 = vmatprep.subr.mxu0 0.0
  %1365 = vmatpush1.msra.mxu0 %v288
  %1366 = vmatprep.subr.mxu0 0.0
  %1367 = vmatpush1.msra.mxu0 %v289
  %1368 = vmatprep.subr.mxu0 0.0
  %1369 = vmatpush1.msra.mxu0 0.0
  %1370 = vmatprep.subr.mxu0 0.0
  %1371 = vmatpush1.msra.mxu0 0.0
  %1372 = vmatprep.subr.mxu0 0.0
  %1373 = vmatpush1.msra.mxu0 0.0
  %1374 = vmatprep.subr.mxu0 0.0
  %1375 = vmatpush1.msra.mxu0 0.0
  %1376 = vmatprep.subr.mxu0 0.0
  %1377 = vmatpush1.msra.mxu0 0.0
  %1378 = vmatprep.subr.mxu0 0.0
  %1379 = vmatpush1.msra.mxu0 0.0
  %1380 = vmatprep.subr.mxu0 0.0
  %1381 = vmatpush1.msra.mxu0 0.0
  %1382 = vmatprep.subr.mxu0 0.0
  %1383 = vmatpush1.msra.mxu0 0.0
  %1384 = vmatprep.subr.mxu0 0.0
  %1385 = vmatpush1.msra.mxu0 0.0
  %1386 = vmatprep.subr.mxu0 0.0
  %1387 = vmatpush1.msra.mxu0 0.0
  %1388 = vmatprep.subr.mxu0 0.0
  %1389 = vmatpush1.msra.mxu0 0.0
  %1390 = vmatprep.subr.mxu0 0.0
  %1391 = vmatpush1.msra.mxu0 0.0
  %1392 = vmatprep.subr.mxu0 0.0
  %1393 = vmatpush1.msra.mxu0 0.0
  %1394 = vmatprep.subr.mxu0 0.0
  %1395 = vmatpush1.msra.mxu0 0.0
  %1396 = vmatprep.subr.mxu0 0.0
  %1397 = vmatpush1.msra.mxu0 0.0
  %1398 = vmatprep.subr.mxu0 0.0
  %1399 = vmatpush1.msra.mxu0 0.0
  %1400 = vmatprep.mubr.f32.mxu0 0.0
  %1401 = vmatmul.mubr.f32.gmra.mrb[0].mxu0 %v1258
  %v1402 = vpop.f32.mrb[0].mxu0
  %v1403 = vadd.f32 0.0, %v1402
  %v1404 = vpop.f32.mrb[0].mxu0
  %1405 = vdwg.mxu0
  %v1406 = vadd.f32 %v1335, %v1403
  %v1407 = vtanh.pop %v1406
  %v1408 = vld [vmem:[%s1334 + $0x8] sm:$0xff]
  %1409 = vmatprep.subr.mxu0 0.0
  %1410 = vmatpush1.msra.mxu0 %v274
  %1411 = vmatprep.subr.mxu0 0.0
  %1412 = vmatpush1.msra.mxu0 %v275
  %1413 = vmatprep.subr.mxu0 0.0
  %1414 = vmatpush1.msra.mxu0 %v276
  %1415 = vmatprep.subr.mxu0 0.0
  %1416 = vmatpush1.msra.mxu0 %v277
  %1417 = vmatprep.subr.mxu0 0.0
  %1418 = vmatpush1.msra.mxu0 %v278
  %1419 = vmatprep.subr.mxu0 0.0
  %1420 = vmatpush1.msra.mxu0 %v279
  %1421 = vmatprep.subr.mxu0 0.0
  %1422 = vmatpush1.msra.mxu0 %v280
  %1423 = vmatprep.subr.mxu0 0.0
  %1424 = vmatpush1.msra.mxu0 %v281
  %1425 = vmatprep.subr.mxu0 0.0
  %1426 = vmatpush1.msra.mxu0 %v282
  %1427 = vmatprep.subr.mxu0 0.0
  %1428 = vmatpush1.msra.mxu0 %v283
  %1429 = vmatprep.subr.mxu0 0.0
  %1430 = vmatpush1.msra.mxu0 %v284
  %1431 = vmatprep.subr.mxu0 0.0
  %1432 = vmatpush1.msra.mxu0 %v285
  %1433 = vmatprep.subr.mxu0 0.0
  %1434 = vmatpush1.msra.mxu0 %v286
  %1435 = vmatprep.subr.mxu0 0.0
  %1436 = vmatpush1.msra.mxu0 %v287
  %1437 = vmatprep.subr.mxu0 0.0
  %1438 = vmatpush1.msra.mxu0 %v288
  %1439 = vmatprep.subr.mxu0 0.0
  %1440 = vmatpush1.msra.mxu0 %v289
  %1441 = vmatprep.subr.mxu0 0.0
  %1442 = vmatpush1.msra.mxu0 0.0
  %1443 = vmatprep.subr.mxu0 0.0
  %1444 = vmatpush1.msra.mxu0 0.0
  %1445 = vmatprep.subr.mxu0 0.0
  %1446 = vmatpush1.msra.mxu0 0.0
  %1447 = vmatprep.subr.mxu0 0.0
  %1448 = vmatpush1.msra.mxu0 0.0
  %1449 = vmatprep.subr.mxu0 0.0
  %1450 = vmatpush1.msra.mxu0 0.0
  %1451 = vmatprep.subr.mxu0 0.0
  %1452 = vmatpush1.msra.mxu0 0.0
  %1453 = vmatprep.subr.mxu0 0.0
  %1454 = vmatpush1.msra.mxu0 0.0
  %1455 = vmatprep.subr.mxu0 0.0
  %1456 = vmatpush1.msra.mxu0 0.0
  %1457 = vmatprep.subr.mxu0 0.0
  %1458 = vmatpush1.msra.mxu0 0.0
  %1459 = vmatprep.subr.mxu0 0.0
  %1460 = vmatpush1.msra.mxu0 0.0
  %1461 = vmatprep.subr.mxu0 0.0
  %1462 = vmatpush1.msra.mxu0 0.0
  %1463 = vmatprep.subr.mxu0 0.0
  %1464 = vmatpush1.msra.mxu0 0.0
  %1465 = vmatprep.subr.mxu0 0.0
  %1466 = vmatpush1.msra.mxu0 0.0
  %1467 = vmatprep.subr.mxu0 0.0
  %1468 = vmatpush1.msra.mxu0 0.0
  %1469 = vmatprep.subr.mxu0 0.0
  %1470 = vmatpush1.msra.mxu0 0.0
  %1471 = vmatprep.subr.mxu0 0.0
  %1472 = vmatpush1.msra.mxu0 0.0
  %1473 = vmatprep.mubr.f32.mxu0 0.0
  %1474 = vmatmul.mubr.f32.gmra.mrb[0].mxu0 %v1331
  %v1475 = vpop.f32.mrb[0].mxu0
  %v1476 = vadd.f32 0.0, %v1475
  %v1477 = vpop.f32.mrb[0].mxu0
  %1478 = vdwg.mxu0
  %v1479 = vadd.f32 %v1408, %v1476
  %v1480 = vtanh.pop %v1479
  %1481 = vst [vmem:[%s1334] sm:$0xff] %v1407
  %1482 = vst [vmem:[%s1334 + $0x8] sm:$0xff] %v1480
  %1483 = vst [vmem:[#allocation2] sm:$0xff] %v1407
  %1484 = vst [vmem:[#allocation2 + $0x8] sm:$0xff] %v1480
  // Predicated region
  $region38: #{encoder_forward.1} parent=0 // pred_check
    %p1485 = pneg %p31
  $region39: #{encoder_forward.1} parent=0 // pred_check_branch
    %1487 = sbr.rel (%p1485) target = $region41
  $region40: #{encoder_forward.1} parent=0 // pred_region
    %v1488 = vld [vmem:[#allocation2] sm:$0xff]
    %v1489 = vld [vmem:[#allocation2 + $0x8] sm:$0xff]
    %v1490 = vld [vmem:[%s4] sm:$0xff]
    %v1491 = vld [vmem:[%s4 + $0x8] sm:$0xff]
    %v1492 = vld [vmem:[%s4 + $0x10] sm:$0xff]
    %v1493 = vld [vmem:[%s4 + $0x18] sm:$0xff]
    %v1494 = vld [vmem:[%s4 + $0x20] sm:$0xff]
    %v1495 = vld [vmem:[%s4 + $0x28] sm:$0xff]
    %v1496 = vld [vmem:[%s4 + $0x30] sm:$0xff]
    %v1497 = vld [vmem:[%s4 + $0x38] sm:$0xff]
    %v1498 = vld [vmem:[%s4 + $0x40] sm:$0xff]
    %v1499 = vld [vmem:[%s4 + $0x48] sm:$0xff]
    %v1500 = vld [vmem:[%s4 + $0x50] sm:$0xff]
    %v1501 = vld [vmem:[%s4 + $0x58] sm:$0xff]
    %v1502 = vld [vmem:[%s4 + $0x60] sm:$0xff]
    %v1503 = vld [vmem:[%s4 + $0x68] sm:$0xff]
    %v1504 = vld [vmem:[%s4 + $0x70] sm:$0xff]
    %v1505 = vld [vmem:[%s4 + $0x78] sm:$0xff]
    %v1506 = vld [vmem:[%s5] sm:$0x1]
    %v1508 = vlaneseq
    %v1509 = vshrl.u32 %v1508, 7
    %v1510 = vsub.s32 0, %v1509
    %v1511 = vrot.slane %v1506, %v1510
    %1513 = vmatprep.subr.mxu0 0.0
    %1514 = vmatpush1.msra.mxu0 %v1490
    %1515 = vmatprep.subr.mxu0 0.0
    %1516 = vmatpush1.msra.mxu0 %v1491
    %1517 = vmatprep.subr.mxu0 0.0
    %1518 = vmatpush1.msra.mxu0 %v1492
    %1519 = vmatprep.subr.mxu0 0.0
    %1520 = vmatpush1.msra.mxu0 %v1493
    %1521 = vmatprep.subr.mxu0 0.0
    %1522 = vmatpush1.msra.mxu0 %v1494
    %1523 = vmatprep.subr.mxu0 0.0
    %1524 = vmatpush1.msra.mxu0 %v1495
    %1525 = vmatprep.subr.mxu0 0.0
    %1526 = vmatpush1.msra.mxu0 %v1496
    %1527 = vmatprep.subr.mxu0 0.0
    %1528 = vmatpush1.msra.mxu0 %v1497
    %1529 = vmatprep.subr.mxu0 0.0
    %1530 = vmatpush1.msra.mxu0 %v1498
    %1531 = vmatprep.subr.mxu0 0.0
    %1532 = vmatpush1.msra.mxu0 %v1499
    %1533 = vmatprep.subr.mxu0 0.0
    %1534 = vmatpush1.msra.mxu0 %v1500
    %1535 = vmatprep.subr.mxu0 0.0
    %1536 = vmatpush1.msra.mxu0 %v1501
    %1537 = vmatprep.subr.mxu0 0.0
    %1538 = vmatpush1.msra.mxu0 %v1502
    %1539 = vmatprep.subr.mxu0 0.0
    %1540 = vmatpush1.msra.mxu0 %v1503
    %1541 = vmatprep.subr.mxu0 0.0
    %1542 = vmatpush1.msra.mxu0 %v1504
    %1543 = vmatprep.subr.mxu0 0.0
    %1544 = vmatpush1.msra.mxu0 %v1505
    %1545 = vmatprep.subr.mxu0 0.0
    %1546 = vmatpush1.msra.mxu0 0.0
    %1547 = vmatprep.subr.mxu0 0.0
    %1548 = vmatpush1.msra.mxu0 0.0
    %1549 = vmatprep.subr.mxu0 0.0
    %1550 = vmatpush1.msra.mxu0 0.0
    %1551 = vmatprep.subr.mxu0 0.0
    %1552 = vmatpush1.msra.mxu0 0.0
    %1553 = vmatprep.subr.mxu0 0.0
    %1554 = vmatpush1.msra.mxu0 0.0
    %1555 = vmatprep.subr.mxu0 0.0
    %1556 = vmatpush1.msra.mxu0 0.0
    %1557 = vmatprep.subr.mxu0 0.0
    %1558 = vmatpush1.msra.mxu0 0.0
    %1559 = vmatprep.subr.mxu0 0.0
    %1560 = vmatpush1.msra.mxu0 0.0
    %1561 = vmatprep.subr.mxu0 0.0
    %1562 = vmatpush1.msra.mxu0 0.0
    %1563 = vmatprep.subr.mxu0 0.0
    %1564 = vmatpush1.msra.mxu0 0.0
    %1565 = vmatprep.subr.mxu0 0.0
    %1566 = vmatpush1.msra.mxu0 0.0
    %1567 = vmatprep.subr.mxu0 0.0
    %1568 = vmatpush1.msra.mxu0 0.0
    %1569 = vmatprep.subr.mxu0 0.0
    %1570 = vmatpush1.msra.mxu0 0.0
    %1571 = vmatprep.subr.mxu0 0.0
    %1572 = vmatpush1.msra.mxu0 0.0
    %1573 = vmatprep.subr.mxu0 0.0
    %1574 = vmatpush1.msra.mxu0 0.0
    %1575 = vmatprep.subr.mxu0 0.0
    %1576 = vmatpush1.msra.mxu0 0.0
    %1577 = vmatprep.mubr.f32.mxu0 0.0
    %1578 = vmatmul.mubr.f32.gmra.mrb[0].mxu0 %v1488
    %v1579 = vpop.f32.mrb[0].mxu0
    %v1580 = vadd.f32 %v1511, %v1579
    %v1581 = vpop.f32.mrb[0].mxu0
    %1582 = vmatprep.mubr.f32.mxu0 0.0
    %1583 = vmatmul.mubr.f32.gmra.mrb[0].mxu0 %v1489
    %v1584 = vpop.f32.mrb[0].mxu0
    %v1585 = vadd.f32 %v1511, %v1584
    %v1586 = vpop.f32.mrb[0].mxu0
    %1587 = vdwg.mxu0
    %v1588 = vmax.f32 %v1580, 0.0
    %v1589 = vmax.f32 %v1585, 0.0
    %v1590 = vld [vmem:[%s6] sm:$0xff]
    %v1591 = vld [vmem:[%s6 + $0x8] sm:$0xff]
    %v1592 = vld [vmem:[%s6 + $0x10] sm:$0xff]
    %v1593 = vld [vmem:[%s6 + $0x18] sm:$0xff]
    %v1594 = vld [vmem:[%s6 + $0x20] sm:$0xff]
    %v1595 = vld [vmem:[%s6 + $0x28] sm:$0xff]
    %v1596 = vld [vmem:[%s6 + $0x30] sm:$0xff]
    %v1597 = vld [vmem:[%s6 + $0x38] sm:$0xff]
    %v1598 = vld [vmem:[%s6 + $0x40] sm:$0xff]
    %v1599 = vld [vmem:[%s6 + $0x48] sm:$0xff]
    %v1600 = vld [vmem:[%s6 + $0x50] sm:$0xff]
    %v1601 = vld [vmem:[%s6 + $0x58] sm:$0xff]
    %v1602 = vld [vmem:[%s6 + $0x60] sm:$0xff]
    %v1603 = vld [vmem:[%s6 + $0x68] sm:$0xff]
    %v1604 = vld [vmem:[%s6 + $0x70] sm:$0xff]
    %v1605 = vld [vmem:[%s6 + $0x78] sm:$0xff]
    %v1606 = vld [vmem:[%s7] sm:$0x1]
    %v1608 = vlaneseq
    %v1609 = vshrl.u32 %v1608, 7
    %v1610 = vsub.s32 0, %v1609
    %v1611 = vrot.slane %v1606, %v1610
    %1613 = vmatprep.subr.mxu0 0.0
    %1614 = vmatpush1.msra.mxu0 %v1590
    %1615 = vmatprep.subr.mxu0 0.0
    %1616 = vmatpush1.msra.mxu0 %v1591
    %1617 = vmatprep.subr.mxu0 0.0
    %1618 = vmatpush1.msra.mxu0 %v1592
    %1619 = vmatprep.subr.mxu0 0.0
    %1620 = vmatpush1.msra.mxu0 %v1593
    %1621 = vmatprep.subr.mxu0 0.0
    %1622 = vmatpush1.msra.mxu0 %v1594
    %1623 = vmatprep.subr.mxu0 0.0
    %1624 = vmatpush1.msra.mxu0 %v1595
    %1625 = vmatprep.subr.mxu0 0.0
    %1626 = vmatpush1.msra.mxu0 %v1596
    %1627 = vmatprep.subr.mxu0 0.0
    %1628 = vmatpush1.msra.mxu0 %v1597
    %1629 = vmatprep.subr.mxu0 0.0
    %1630 = vmatpush1.msra.mxu0 %v1598
    %1631 = vmatprep.subr.mxu0 0.0
    %1632 = vmatpush1.msra.mxu0 %v1599
    %1633 = vmatprep.subr.mxu0 0.0
    %1634 = vmatpush1.msra.mxu0 %v1600
    %1635 = vmatprep.subr.mxu0 0.0
    %1636 = vmatpush1.msra.mxu0 %v1601
    %1637 = vmatprep.subr.mxu0 0.0
    %1638 = vmatpush1.msra.mxu0 %v1602
    %1639 = vmatprep.subr.mxu0 0.0
    %1640 = vmatpush1.msra.mxu0 %v1603
    %1641 = vmatprep.subr.mxu0 0.0
    %1642 = vmatpush1.msra.mxu0 %v1604
    %1643 = vmatprep.subr.mxu0 0.0
    %1644 = vmatpush1.msra.mxu0 %v1605
    %1645 = vmatprep.subr.mxu0 0.0
    %1646 = vmatpush1.msra.mxu0 0.0
    %1647 = vmatprep.subr.mxu0 0.0
    %1648 = vmatpush1.msra.mxu0 0.0
    %1649 = vmatprep.subr.mxu0 0.0
    %1650 = vmatpush1.msra.mxu0 0.0
    %1651 = vmatprep.subr.mxu0 0.0
    %1652 = vmatpush1.msra.mxu0 0.0
    %1653 = vmatprep.subr.mxu0 0.0
    %1654 = vmatpush1.msra.mxu0 0.0
    %1655 = vmatprep.subr.mxu0 0.0
    %1656 = vmatpush1.msra.mxu0 0.0
    %1657 = vmatprep.subr.mxu0 0.0
    %1658 = vmatpush1.msra.mxu0 0.0
    %1659 = vmatprep.subr.mxu0 0.0
    %1660 = vmatpush1.msra.mxu0 0.0
    %1661 = vmatprep.subr.mxu0 0.0
    %1662 = vmatpush1.msra.mxu0 0.0
    %1663 = vmatprep.subr.mxu0 0.0
    %1664 = vmatpush1.msra.mxu0 0.0
    %1665 = vmatprep.subr.mxu0 0.0
    %1666 = vmatpush1.msra.mxu0 0.0
    %1667 = vmatprep.subr.mxu0 0.0
    %1668 = vmatpush1.msra.mxu0 0.0
    %1669 = vmatprep.subr.mxu0 0.0
    %1670 = vmatpush1.msra.mxu0 0.0
    %1671 = vmatprep.subr.mxu0 0.0
    %1672 = vmatpush1.msra.mxu0 0.0
    %1673 = vmatprep.subr.mxu0 0.0
    %1674 = vmatpush1.msra.mxu0 0.0
    %1675 = vmatprep.subr.mxu0 0.0
    %1676 = vmatpush1.msra.mxu0 0.0
    %1677 = vmatprep.mubr.f32.mxu0 0.0
    %1678 = vmatmul.mubr.f32.gmra.mrb[0].mxu0 %v1588
    %v1679 = vpop.f32.mrb[0].mxu0
    %v1680 = vadd.f32 %v1611, %v1679
    %v1681 = vpop.f32.mrb[0].mxu0
    %1682 = vmatprep.mubr.f32.mxu0 0.0
    %1683 = vmatmul.mubr.f32.gmra.mrb[0].mxu0 %v1589
    %v1684 = vpop.f32.mrb[0].mxu0
    %v1685 = vadd.f32 %v1611, %v1684
    %v1686 = vpop.f32.mrb[0].mxu0
    %1687 = vdwg.mxu0
    %v1688 = vtanh.pop %v1680
    %v1689 = vtanh.pop %v1685
    %1690 = vst [vmem:[%s9] sm:$0xff] %v1688
    %1691 = vst [vmem:[%s9 + $0x8] sm:$0xff] %v1689
  $region41: #{encoder_forward.1} parent=0 // pred_fallthru
    _
  // Predicated region
  $region42: #{encoder_forward.1} parent=0 // pred_check
    _
  $region43: #{encoder_forward.1} parent=0 // pred_check_branch
    %1693 = sbr.rel (0) target = $region45
  $region44: #{encoder_forward.1} parent=0 // pred_region
    _
  $region45: #{encoder_forward.1} parent=0 // pred_fallthru
    _
  // Predicated region
  $region46: #{encoder_forward.1} parent=0 // pred_check
    _
  $region47: #{encoder_forward.1} parent=0 // pred_check_branch
    %1695 = sbr.rel (0) target = $region49
  $region48: #{encoder_forward.1} parent=0 // pred_region
    _
  $region49: #{encoder_forward.1} parent=0 // pred_fallthru
    _
  // Predicated region
  $region50: #{encoder_forward.1} parent=0 // pred_check
    _
  $region51: #{encoder_forward.1} parent=0 // pred_check_branch
    %1697 = sbr.rel (0) target = $region53
  $region52: #{encoder_forward.1} parent=0 // pred_region
    _
  $region53: #{encoder_forward.1} parent=0 // pred_fallthru
    _
  // Predicated region
  $region54: #{encoder_forward.1} parent=0 // pred_check
    _
  $region55: #{encoder_forward.1} parent=0 // pred_check_branch
    %1699 = sbr.rel (0) target = $region57
  $region56: #{encoder_forward.1} parent=0 // pred_region
    _
  $region57: #{encoder_forward.1} parent=0 // pred_fallthru
    _

</llo_original>
